<compile_context>
chip_gen: v7x
topology: tpu7x:2x2x1
jax: 0.10.0
libtpu: 0.0.40
codegen_flags: <defaults>
</compile_context>

<pallas_src>
import functools

import jax
import jax.numpy as jnp
import numpy as np
from jax.experimental import pallas as pl
from jax.experimental.pallas import tpu as pltpu


def _sigmoid(x):
    # Stable, divide-free sigmoid: rides the EUP tanh path instead of a VALU divide.
    return 0.5 * jnp.tanh(0.5 * x) + 0.5


def fused_disc_kernel(x_ref, *rest, num_layers, seq_len, batch_pad):
    """Fused forward: num_layers LSTM layers + Linear(H, 1), single invocation.

    Argument layout (after x_ref):
      for each layer: w_ih_t (D_l, 4H), w_hh_t (H, 4H), bias (1, 4H)
      then: lin_w_t (H, 1), lin_b (1, 1)
      then: out_ref (T*Bp, 1)            [output]
      then: hseq_sc (T*Bp, H)            [VMEM scratch: inter-layer activations]
    """
    hseq_sc = rest[-1]
    out_ref = rest[-2]
    param_refs = rest[:-2]
    T, Bp = seq_len, batch_pad

    acts = x_ref[...].astype(jnp.float32)                     # (T*Bp, D_in)
    for layer in range(num_layers):
        w_ih_ref, w_hh_ref, b_ref = param_refs[3 * layer: 3 * layer + 3]
        H = w_hh_ref.shape[0]
        w_hh = w_hh_ref[...]                                   # (H, 4H), read once
        bias = jnp.broadcast_to(b_ref[...], (Bp, 4 * H))       # hoisted out of time loop

        # Input projection for ALL time steps in one MXU pass: (T*Bp, 4H).
        xw = jnp.dot(acts, w_ih_ref[...], preferred_element_type=jnp.float32)

        h = jnp.zeros((Bp, H), jnp.float32)
        c = jnp.zeros((Bp, H), jnp.float32)
        for t in range(T):  # static unroll; T is a small compile-time constant
            gates = (
                xw[t * Bp:(t + 1) * Bp, :]                     # aligned sublane slice
                + jnp.dot(h, w_hh, preferred_element_type=jnp.float32)
                + bias
            )
            i_g = _sigmoid(gates[:, 0 * H:1 * H])
            f_g = _sigmoid(gates[:, 1 * H:2 * H])
            g_g = jnp.tanh(gates[:, 2 * H:3 * H])
            o_g = _sigmoid(gates[:, 3 * H:4 * H])
            c = f_g * c + i_g * g_g
            h = o_g * jnp.tanh(c)
            hseq_sc[pl.ds(t * Bp, Bp), :] = h                  # aligned VMEM store
        acts = hseq_sc[...]                                     # (T*Bp, H): next layer input

    # Final Linear(H, 1), fused: one matmul, one dense writeback.
    lin_w_ref, lin_b_ref = param_refs[-2], param_refs[-1]
    pred = jnp.dot(acts, lin_w_ref[...], preferred_element_type=jnp.float32) + lin_b_ref[...]
    out_ref[...] = pred.astype(out_ref.dtype)


def discriminator_forward(inputs, lstm_params, lin_w, lin_b):
    """inputs: (T, B, input_size). Returns pred: (T, B, 1)."""
    T, B, D = inputs.shape
    H = lstm_params[0][1].shape[1]           # w_hh: (4H, H)
    num_layers = len(lstm_params)

    # Pad batch up to a sublane multiple (>=8) so every in-kernel slice/store is aligned.
    Bp = max(8, ((B + 7) // 8) * 8)
    if Bp != B:
        inputs = jnp.pad(inputs, ((0, 0), (0, Bp - B), (0, 0)))
    x2d = inputs.reshape(T * Bp, D).astype(jnp.float32)

    # Weight prep (glue, runs in XLA): pre-transpose so the kernel never transposes.
    flat = []
    for (w_ih, w_hh, b_ih, b_hh) in lstm_params:
        flat += [
            jnp.transpose(w_ih),              # (D_l, 4H)
            jnp.transpose(w_hh),              # (H,   4H)
            (b_ih + b_hh)[None, :],           # (1,   4H)
        ]
    flat += [jnp.transpose(lin_w), lin_b[None, :]]   # (H, 1), (1, 1)

    kernel = functools.partial(
        fused_disc_kernel, num_layers=num_layers, seq_len=T, batch_pad=Bp)

    out = pl.pallas_call(
        kernel,
        out_shape=jax.ShapeDtypeStruct((T * Bp, 1), jnp.float32),
        scratch_shapes=[pltpu.VMEM((T * Bp, H), jnp.float32)],
    )(x2d, *flat)

    return out.reshape(T, Bp, 1)[:, :B, :]


def make_params(key, input_size, hidden_size, num_layers):
    """Deterministic synthetic params. LSTM: U(-1/sqrt(H), 1/sqrt(H)) (PyTorch default).
    Linear: N(0, 0.02) weight, zero bias (per _init_weights)."""
    k = 1.0 / np.sqrt(hidden_size)
    lstm_params = []
    for layer in range(num_layers):
        d_in = input_size if layer == 0 else hidden_size
        key, k1, k2, k3, k4 = jax.random.split(key, 5)
        w_ih = jax.random.uniform(k1, (4 * hidden_size, d_in), jnp.float32, -k, k)
        w_hh = jax.random.uniform(k2, (4 * hidden_size, hidden_size), jnp.float32, -k, k)
        b_ih = jax.random.uniform(k3, (4 * hidden_size,), jnp.float32, -k, k)
        b_hh = jax.random.uniform(k4, (4 * hidden_size,), jnp.float32, -k, k)
        lstm_params.append((w_ih, w_hh, b_ih, b_hh))
    key, kw = jax.random.split(key)
    lin_w = 0.02 * jax.random.normal(kw, (1, hidden_size), jnp.float32)
    lin_b = jnp.zeros((1,), jnp.float32)
    return lstm_params, lin_w, lin_b


def discriminator_ref(inputs, lstm_params, lin_w, lin_b):
    """Pure-JAX reference (lax.scan) for correctness check."""
    h_seq = inputs
    for (w_ih, w_hh, b_ih, b_hh) in lstm_params:
        H = w_hh.shape[1]
        B = inputs.shape[1]

        def step(carry, x_t, w_ih=w_ih, w_hh=w_hh, b_ih=b_ih, b_hh=b_hh):
            h, c = carry
            gates = x_t @ w_ih.T + h @ w_hh.T + b_ih + b_hh
            i, f, g, o = jnp.split(gates, 4, axis=-1)
            i = jax.nn.sigmoid(i)
            f = jax.nn.sigmoid(f)
            g = jnp.tanh(g)
            o = jax.nn.sigmoid(o)
            c = f * c + i * g
            h = o * jnp.tanh(c)
            return (h, c), h

        init = (jnp.zeros((B, H), jnp.float32), jnp.zeros((B, H), jnp.float32))
        _, h_seq = jax.lax.scan(step, init, h_seq)
    return h_seq @ lin_w.T + lin_b


if __name__ == "__main__":
    T, B = 8, 4
    INPUT_SIZE, HIDDEN_SIZE, NUM_LAYERS = 8, 32, 2

    key = jax.random.PRNGKey(0)
    key, kx = jax.random.split(key)
    inputs = jax.random.normal(kx, (T, B, INPUT_SIZE), jnp.float32)  # (seq, batch, feat)

    lstm_params, lin_w, lin_b = make_params(key, INPUT_SIZE, HIDDEN_SIZE, NUM_LAYERS)

    pred = discriminator_forward(inputs, lstm_params, lin_w, lin_b)
    pred = jax.block_until_ready(pred)
    assert pred.shape == (T, B, 1), pred.shape

    ref = jax.block_until_ready(discriminator_ref(inputs, lstm_params, lin_w, lin_b))
    np.testing.assert_allclose(np.asarray(pred), np.asarray(ref), atol=1e-4, rtol=1e-4)

    print("KERNEL_OK")
</pallas_src>

<mosaic_0001>
module attributes {stable_mosaic.version = 11 : i64} {
  func.func @fused_disc_kernel(%arg0: memref<64x8xf32, #tpu.memory_space<vmem>>, %arg1: memref<8x128xf32, #tpu.memory_space<vmem>>, %arg2: memref<32x128xf32, #tpu.memory_space<vmem>>, %arg3: memref<1x128xf32, #tpu.memory_space<vmem>>, %arg4: memref<32x128xf32, #tpu.memory_space<vmem>>, %arg5: memref<32x128xf32, #tpu.memory_space<vmem>>, %arg6: memref<1x128xf32, #tpu.memory_space<vmem>>, %arg7: memref<32x1xf32, #tpu.memory_space<vmem>>, %arg8: memref<1x1xf32, #tpu.memory_space<vmem>>, %arg9: memref<64x1xf32, #tpu.memory_space<vmem>>, %arg10: memref<64x32xf32, #tpu.memory_space<vmem>>) attributes {dimension_semantics = [], scalar_prefetch = 0 : i64, scratch_operands = 1 : i64, tpu.core_type = #tpu.core_type<tc>} {
    %c0 = arith.constant 0 : index
    %c0_0 = arith.constant 0 : index
    %0 = vector.load %arg0[%c0, %c0_0] : memref<64x8xf32, #tpu.memory_space<vmem>>, vector<64x8xf32>
    %c0_1 = arith.constant 0 : index
    %c0_2 = arith.constant 0 : index
    %1 = vector.load %arg2[%c0_1, %c0_2] : memref<32x128xf32, #tpu.memory_space<vmem>>, vector<32x128xf32>
    %c0_3 = arith.constant 0 : index
    %c0_4 = arith.constant 0 : index
    %2 = vector.load %arg3[%c0_3, %c0_4] : memref<1x128xf32, #tpu.memory_space<vmem>>, vector<1x128xf32>
    %3 = vector.shape_cast %2 : vector<1x128xf32> to vector<1x128xf32>
    %4 = vector.broadcast %3 : vector<1x128xf32> to vector<8x128xf32>
    %c0_5 = arith.constant 0 : index
    %c0_6 = arith.constant 0 : index
    %5 = vector.load %arg1[%c0_5, %c0_6] : memref<8x128xf32, #tpu.memory_space<vmem>>, vector<8x128xf32>
    %cst = arith.constant dense<0.000000e+00> : vector<64x128xf32>
    %6 = tpu.matmul %0, %5, %cst {dimension_numbers = #tpu.dot_dimension_numbers<[1], [0], [0], [1], [0, 0, 1, 1], [], []>} : vector<64x8xf32>, vector<8x128xf32>, vector<64x128xf32> -> vector<64x128xf32>
    %cst_7 = arith.constant 0.000000e+00 : f32
    %7 = vector.broadcast %cst_7 : f32 to vector<8x32xf32>
    %cst_8 = arith.constant 0.000000e+00 : f32
    %8 = vector.broadcast %cst_8 : f32 to vector<8x32xf32>
    %9 = vector.extract_strided_slice %6 {offsets = [0, 0], sizes = [8, 128], strides = [1, 1]} : vector<64x128xf32> to vector<8x128xf32>
    %cst_9 = arith.constant dense<0.000000e+00> : vector<8x128xf32>
    %10 = tpu.matmul %7, %1, %cst_9 {dimension_numbers = #tpu.dot_dimension_numbers<[1], [0], [0], [1], [0, 0, 1, 1], [], []>} : vector<8x32xf32>, vector<32x128xf32>, vector<8x128xf32> -> vector<8x128xf32>
    %11 = arith.addf %9, %10 : vector<8x128xf32>
    %12 = arith.addf %11, %4 : vector<8x128xf32>
    %13 = vector.extract_strided_slice %12 {offsets = [0, 0], sizes = [8, 32], strides = [1, 1]} : vector<8x128xf32> to vector<8x32xf32>
    %cst_10 = arith.constant 5.000000e-01 : f32
    %14 = vector.broadcast %cst_10 : f32 to vector<8x32xf32>
    %15 = arith.mulf %14, %13 : vector<8x32xf32>
    %16 = math.tanh %15 : vector<8x32xf32>
    %cst_11 = arith.constant 5.000000e-01 : f32
    %17 = vector.broadcast %cst_11 : f32 to vector<8x32xf32>
    %18 = arith.mulf %17, %16 : vector<8x32xf32>
    %cst_12 = arith.constant 5.000000e-01 : f32
    %19 = vector.broadcast %cst_12 : f32 to vector<8x32xf32>
    %20 = arith.addf %18, %19 : vector<8x32xf32>
    %21 = vector.extract_strided_slice %12 {offsets = [0, 32], sizes = [8, 32], strides = [1, 1]} : vector<8x128xf32> to vector<8x32xf32>
    %cst_13 = arith.constant 5.000000e-01 : f32
    %22 = vector.broadcast %cst_13 : f32 to vector<8x32xf32>
    %23 = arith.mulf %22, %21 : vector<8x32xf32>
    %24 = math.tanh %23 : vector<8x32xf32>
    %cst_14 = arith.constant 5.000000e-01 : f32
    %25 = vector.broadcast %cst_14 : f32 to vector<8x32xf32>
    %26 = arith.mulf %25, %24 : vector<8x32xf32>
    %cst_15 = arith.constant 5.000000e-01 : f32
    %27 = vector.broadcast %cst_15 : f32 to vector<8x32xf32>
    %28 = arith.addf %26, %27 : vector<8x32xf32>
    %29 = vector.extract_strided_slice %12 {offsets = [0, 64], sizes = [8, 32], strides = [1, 1]} : vector<8x128xf32> to vector<8x32xf32>
    %30 = math.tanh %29 : vector<8x32xf32>
    %31 = vector.extract_strided_slice %12 {offsets = [0, 96], sizes = [8, 32], strides = [1, 1]} : vector<8x128xf32> to vector<8x32xf32>
    %cst_16 = arith.constant 5.000000e-01 : f32
    %32 = vector.broadcast %cst_16 : f32 to vector<8x32xf32>
    %33 = arith.mulf %32, %31 : vector<8x32xf32>
    %34 = math.tanh %33 : vector<8x32xf32>
    %cst_17 = arith.constant 5.000000e-01 : f32
    %35 = vector.broadcast %cst_17 : f32 to vector<8x32xf32>
    %36 = arith.mulf %35, %34 : vector<8x32xf32>
    %cst_18 = arith.constant 5.000000e-01 : f32
    %37 = vector.broadcast %cst_18 : f32 to vector<8x32xf32>
    %38 = arith.addf %36, %37 : vector<8x32xf32>
    %39 = arith.mulf %28, %8 : vector<8x32xf32>
    %40 = arith.mulf %20, %30 : vector<8x32xf32>
    %41 = arith.addf %39, %40 : vector<8x32xf32>
    %42 = math.tanh %41 : vector<8x32xf32>
    %43 = arith.mulf %38, %42 : vector<8x32xf32>
    %c0_19 = arith.constant 0 : index
    %c0_20 = arith.constant 0 : index
    %44 = vector.load %arg10[%c0_19, %c0_20] : memref<64x32xf32, #tpu.memory_space<vmem>>, vector<8x32xf32>
    tpu.vector_store %arg10[%c0_19, %c0_20], %43 {strides = array<i32>} : memref<64x32xf32, #tpu.memory_space<vmem>>, vector<8x32xf32>,
    %45 = vector.extract_strided_slice %6 {offsets = [8, 0], sizes = [8, 128], strides = [1, 1]} : vector<64x128xf32> to vector<8x128xf32>
    %cst_21 = arith.constant dense<0.000000e+00> : vector<8x128xf32>
    %46 = tpu.matmul %43, %1, %cst_21 {dimension_numbers = #tpu.dot_dimension_numbers<[1], [0], [0], [1], [0, 0, 1, 1], [], []>} : vector<8x32xf32>, vector<32x128xf32>, vector<8x128xf32> -> vector<8x128xf32>
    %47 = arith.addf %45, %46 : vector<8x128xf32>
    %48 = arith.addf %47, %4 : vector<8x128xf32>
    %49 = vector.extract_strided_slice %48 {offsets = [0, 0], sizes = [8, 32], strides = [1, 1]} : vector<8x128xf32> to vector<8x32xf32>
    %cst_22 = arith.constant 5.000000e-01 : f32
    %50 = vector.broadcast %cst_22 : f32 to vector<8x32xf32>
    %51 = arith.mulf %50, %49 : vector<8x32xf32>
    %52 = math.tanh %51 : vector<8x32xf32>
    %cst_23 = arith.constant 5.000000e-01 : f32
    %53 = vector.broadcast %cst_23 : f32 to vector<8x32xf32>
    %54 = arith.mulf %53, %52 : vector<8x32xf32>
    %cst_24 = arith.constant 5.000000e-01 : f32
    %55 = vector.broadcast %cst_24 : f32 to vector<8x32xf32>
    %56 = arith.addf %54, %55 : vector<8x32xf32>
    %57 = vector.extract_strided_slice %48 {offsets = [0, 32], sizes = [8, 32], strides = [1, 1]} : vector<8x128xf32> to vector<8x32xf32>
    %cst_25 = arith.constant 5.000000e-01 : f32
    %58 = vector.broadcast %cst_25 : f32 to vector<8x32xf32>
    %59 = arith.mulf %58, %57 : vector<8x32xf32>
    %60 = math.tanh %59 : vector<8x32xf32>
    %cst_26 = arith.constant 5.000000e-01 : f32
    %61 = vector.broadcast %cst_26 : f32 to vector<8x32xf32>
    %62 = arith.mulf %61, %60 : vector<8x32xf32>
    %cst_27 = arith.constant 5.000000e-01 : f32
    %63 = vector.broadcast %cst_27 : f32 to vector<8x32xf32>
    %64 = arith.addf %62, %63 : vector<8x32xf32>
    %65 = vector.extract_strided_slice %48 {offsets = [0, 64], sizes = [8, 32], strides = [1, 1]} : vector<8x128xf32> to vector<8x32xf32>
    %66 = math.tanh %65 : vector<8x32xf32>
    %67 = vector.extract_strided_slice %48 {offsets = [0, 96], sizes = [8, 32], strides = [1, 1]} : vector<8x128xf32> to vector<8x32xf32>
    %cst_28 = arith.constant 5.000000e-01 : f32
    %68 = vector.broadcast %cst_28 : f32 to vector<8x32xf32>
    %69 = arith.mulf %68, %67 : vector<8x32xf32>
    %70 = math.tanh %69 : vector<8x32xf32>
    %cst_29 = arith.constant 5.000000e-01 : f32
    %71 = vector.broadcast %cst_29 : f32 to vector<8x32xf32>
    %72 = arith.mulf %71, %70 : vector<8x32xf32>
    %cst_30 = arith.constant 5.000000e-01 : f32
    %73 = vector.broadcast %cst_30 : f32 to vector<8x32xf32>
    %74 = arith.addf %72, %73 : vector<8x32xf32>
    %75 = arith.mulf %64, %41 : vector<8x32xf32>
    %76 = arith.mulf %56, %66 : vector<8x32xf32>
    %77 = arith.addf %75, %76 : vector<8x32xf32>
    %78 = math.tanh %77 : vector<8x32xf32>
    %79 = arith.mulf %74, %78 : vector<8x32xf32>
    %c8 = arith.constant 8 : index
    %c0_31 = arith.constant 0 : index
    %80 = vector.load %arg10[%c8, %c0_31] : memref<64x32xf32, #tpu.memory_space<vmem>>, vector<8x32xf32>
    tpu.vector_store %arg10[%c8, %c0_31], %79 {strides = array<i32>} : memref<64x32xf32, #tpu.memory_space<vmem>>, vector<8x32xf32>,
    %81 = vector.extract_strided_slice %6 {offsets = [16, 0], sizes = [8, 128], strides = [1, 1]} : vector<64x128xf32> to vector<8x128xf32>
    %cst_32 = arith.constant dense<0.000000e+00> : vector<8x128xf32>
    %82 = tpu.matmul %79, %1, %cst_32 {dimension_numbers = #tpu.dot_dimension_numbers<[1], [0], [0], [1], [0, 0, 1, 1], [], []>} : vector<8x32xf32>, vector<32x128xf32>, vector<8x128xf32> -> vector<8x128xf32>
    %83 = arith.addf %81, %82 : vector<8x128xf32>
    %84 = arith.addf %83, %4 : vector<8x128xf32>
    %85 = vector.extract_strided_slice %84 {offsets = [0, 0], sizes = [8, 32], strides = [1, 1]} : vector<8x128xf32> to vector<8x32xf32>
    %cst_33 = arith.constant 5.000000e-01 : f32
    %86 = vector.broadcast %cst_33 : f32 to vector<8x32xf32>
    %87 = arith.mulf %86, %85 : vector<8x32xf32>
    %88 = math.tanh %87 : vector<8x32xf32>
    %cst_34 = arith.constant 5.000000e-01 : f32
    %89 = vector.broadcast %cst_34 : f32 to vector<8x32xf32>
    %90 = arith.mulf %89, %88 : vector<8x32xf32>
    %cst_35 = arith.constant 5.000000e-01 : f32
    %91 = vector.broadcast %cst_35 : f32 to vector<8x32xf32>
    %92 = arith.addf %90, %91 : vector<8x32xf32>
    %93 = vector.extract_strided_slice %84 {offsets = [0, 32], sizes = [8, 32], strides = [1, 1]} : vector<8x128xf32> to vector<8x32xf32>
    %cst_36 = arith.constant 5.000000e-01 : f32
    %94 = vector.broadcast %cst_36 : f32 to vector<8x32xf32>
    %95 = arith.mulf %94, %93 : vector<8x32xf32>
    %96 = math.tanh %95 : vector<8x32xf32>
    %cst_37 = arith.constant 5.000000e-01 : f32
    %97 = vector.broadcast %cst_37 : f32 to vector<8x32xf32>
    %98 = arith.mulf %97, %96 : vector<8x32xf32>
    %cst_38 = arith.constant 5.000000e-01 : f32
    %99 = vector.broadcast %cst_38 : f32 to vector<8x32xf32>
    %100 = arith.addf %98, %99 : vector<8x32xf32>
    %101 = vector.extract_strided_slice %84 {offsets = [0, 64], sizes = [8, 32], strides = [1, 1]} : vector<8x128xf32> to vector<8x32xf32>
    %102 = math.tanh %101 : vector<8x32xf32>
    %103 = vector.extract_strided_slice %84 {offsets = [0, 96], sizes = [8, 32], strides = [1, 1]} : vector<8x128xf32> to vector<8x32xf32>
    %cst_39 = arith.constant 5.000000e-01 : f32
    %104 = vector.broadcast %cst_39 : f32 to vector<8x32xf32>
    %105 = arith.mulf %104, %103 : vector<8x32xf32>
    %106 = math.tanh %105 : vector<8x32xf32>
    %cst_40 = arith.constant 5.000000e-01 : f32
    %107 = vector.broadcast %cst_40 : f32 to vector<8x32xf32>
    %108 = arith.mulf %107, %106 : vector<8x32xf32>
    %cst_41 = arith.constant 5.000000e-01 : f32
    %109 = vector.broadcast %cst_41 : f32 to vector<8x32xf32>
    %110 = arith.addf %108, %109 : vector<8x32xf32>
    %111 = arith.mulf %100, %77 : vector<8x32xf32>
    %112 = arith.mulf %92, %102 : vector<8x32xf32>
    %113 = arith.addf %111, %112 : vector<8x32xf32>
    %114 = math.tanh %113 : vector<8x32xf32>
    %115 = arith.mulf %110, %114 : vector<8x32xf32>
    %c16 = arith.constant 16 : index
    %c0_42 = arith.constant 0 : index
    %116 = vector.load %arg10[%c16, %c0_42] : memref<64x32xf32, #tpu.memory_space<vmem>>, vector<8x32xf32>
    tpu.vector_store %arg10[%c16, %c0_42], %115 {strides = array<i32>} : memref<64x32xf32, #tpu.memory_space<vmem>>, vector<8x32xf32>,
    %117 = vector.extract_strided_slice %6 {offsets = [24, 0], sizes = [8, 128], strides = [1, 1]} : vector<64x128xf32> to vector<8x128xf32>
    %cst_43 = arith.constant dense<0.000000e+00> : vector<8x128xf32>
    %118 = tpu.matmul %115, %1, %cst_43 {dimension_numbers = #tpu.dot_dimension_numbers<[1], [0], [0], [1], [0, 0, 1, 1], [], []>} : vector<8x32xf32>, vector<32x128xf32>, vector<8x128xf32> -> vector<8x128xf32>
    %119 = arith.addf %117, %118 : vector<8x128xf32>
    %120 = arith.addf %119, %4 : vector<8x128xf32>
    %121 = vector.extract_strided_slice %120 {offsets = [0, 0], sizes = [8, 32], strides = [1, 1]} : vector<8x128xf32> to vector<8x32xf32>
    %cst_44 = arith.constant 5.000000e-01 : f32
    %122 = vector.broadcast %cst_44 : f32 to vector<8x32xf32>
    %123 = arith.mulf %122, %121 : vector<8x32xf32>
    %124 = math.tanh %123 : vector<8x32xf32>
    %cst_45 = arith.constant 5.000000e-01 : f32
    %125 = vector.broadcast %cst_45 : f32 to vector<8x32xf32>
    %126 = arith.mulf %125, %124 : vector<8x32xf32>
    %cst_46 = arith.constant 5.000000e-01 : f32
    %127 = vector.broadcast %cst_46 : f32 to vector<8x32xf32>
    %128 = arith.addf %126, %127 : vector<8x32xf32>
    %129 = vector.extract_strided_slice %120 {offsets = [0, 32], sizes = [8, 32], strides = [1, 1]} : vector<8x128xf32> to vector<8x32xf32>
    %cst_47 = arith.constant 5.000000e-01 : f32
    %130 = vector.broadcast %cst_47 : f32 to vector<8x32xf32>
    %131 = arith.mulf %130, %129 : vector<8x32xf32>
    %132 = math.tanh %131 : vector<8x32xf32>
    %cst_48 = arith.constant 5.000000e-01 : f32
    %133 = vector.broadcast %cst_48 : f32 to vector<8x32xf32>
    %134 = arith.mulf %133, %132 : vector<8x32xf32>
    %cst_49 = arith.constant 5.000000e-01 : f32
    %135 = vector.broadcast %cst_49 : f32 to vector<8x32xf32>
    %136 = arith.addf %134, %135 : vector<8x32xf32>
    %137 = vector.extract_strided_slice %120 {offsets = [0, 64], sizes = [8, 32], strides = [1, 1]} : vector<8x128xf32> to vector<8x32xf32>
    %138 = math.tanh %137 : vector<8x32xf32>
    %139 = vector.extract_strided_slice %120 {offsets = [0, 96], sizes = [8, 32], strides = [1, 1]} : vector<8x128xf32> to vector<8x32xf32>
    %cst_50 = arith.constant 5.000000e-01 : f32
    %140 = vector.broadcast %cst_50 : f32 to vector<8x32xf32>
    %141 = arith.mulf %140, %139 : vector<8x32xf32>
    %142 = math.tanh %141 : vector<8x32xf32>
    %cst_51 = arith.constant 5.000000e-01 : f32
    %143 = vector.broadcast %cst_51 : f32 to vector<8x32xf32>
    %144 = arith.mulf %143, %142 : vector<8x32xf32>
    %cst_52 = arith.constant 5.000000e-01 : f32
    %145 = vector.broadcast %cst_52 : f32 to vector<8x32xf32>
    %146 = arith.addf %144, %145 : vector<8x32xf32>
    %147 = arith.mulf %136, %113 : vector<8x32xf32>
    %148 = arith.mulf %128, %138 : vector<8x32xf32>
    %149 = arith.addf %147, %148 : vector<8x32xf32>
    %150 = math.tanh %149 : vector<8x32xf32>
    %151 = arith.mulf %146, %150 : vector<8x32xf32>
    %c24 = arith.constant 24 : index
    %c0_53 = arith.constant 0 : index
    %152 = vector.load %arg10[%c24, %c0_53] : memref<64x32xf32, #tpu.memory_space<vmem>>, vector<8x32xf32>
    tpu.vector_store %arg10[%c24, %c0_53], %151 {strides = array<i32>} : memref<64x32xf32, #tpu.memory_space<vmem>>, vector<8x32xf32>,
    %153 = vector.extract_strided_slice %6 {offsets = [32, 0], sizes = [8, 128], strides = [1, 1]} : vector<64x128xf32> to vector<8x128xf32>
    %cst_54 = arith.constant dense<0.000000e+00> : vector<8x128xf32>
    %154 = tpu.matmul %151, %1, %cst_54 {dimension_numbers = #tpu.dot_dimension_numbers<[1], [0], [0], [1], [0, 0, 1, 1], [], []>} : vector<8x32xf32>, vector<32x128xf32>, vector<8x128xf32> -> vector<8x128xf32>
    %155 = arith.addf %153, %154 : vector<8x128xf32>
    %156 = arith.addf %155, %4 : vector<8x128xf32>
    %157 = vector.extract_strided_slice %156 {offsets = [0, 0], sizes = [8, 32], strides = [1, 1]} : vector<8x128xf32> to vector<8x32xf32>
    %cst_55 = arith.constant 5.000000e-01 : f32
    %158 = vector.broadcast %cst_55 : f32 to vector<8x32xf32>
    %159 = arith.mulf %158, %157 : vector<8x32xf32>
    %160 = math.tanh %159 : vector<8x32xf32>
    %cst_56 = arith.constant 5.000000e-01 : f32
    %161 = vector.broadcast %cst_56 : f32 to vector<8x32xf32>
    %162 = arith.mulf %161, %160 : vector<8x32xf32>
    %cst_57 = arith.constant 5.000000e-01 : f32
    %163 = vector.broadcast %cst_57 : f32 to vector<8x32xf32>
    %164 = arith.addf %162, %163 : vector<8x32xf32>
    %165 = vector.extract_strided_slice %156 {offsets = [0, 32], sizes = [8, 32], strides = [1, 1]} : vector<8x128xf32> to vector<8x32xf32>
    %cst_58 = arith.constant 5.000000e-01 : f32
    %166 = vector.broadcast %cst_58 : f32 to vector<8x32xf32>
    %167 = arith.mulf %166, %165 : vector<8x32xf32>
    %168 = math.tanh %167 : vector<8x32xf32>
    %cst_59 = arith.constant 5.000000e-01 : f32
    %169 = vector.broadcast %cst_59 : f32 to vector<8x32xf32>
    %170 = arith.mulf %169, %168 : vector<8x32xf32>
    %cst_60 = arith.constant 5.000000e-01 : f32
    %171 = vector.broadcast %cst_60 : f32 to vector<8x32xf32>
    %172 = arith.addf %170, %171 : vector<8x32xf32>
    %173 = vector.extract_strided_slice %156 {offsets = [0, 64], sizes = [8, 32], strides = [1, 1]} : vector<8x128xf32> to vector<8x32xf32>
    %174 = math.tanh %173 : vector<8x32xf32>
    %175 = vector.extract_strided_slice %156 {offsets = [0, 96], sizes = [8, 32], strides = [1, 1]} : vector<8x128xf32> to vector<8x32xf32>
    %cst_61 = arith.constant 5.000000e-01 : f32
    %176 = vector.broadcast %cst_61 : f32 to vector<8x32xf32>
    %177 = arith.mulf %176, %175 : vector<8x32xf32>
    %178 = math.tanh %177 : vector<8x32xf32>
    %cst_62 = arith.constant 5.000000e-01 : f32
    %179 = vector.broadcast %cst_62 : f32 to vector<8x32xf32>
    %180 = arith.mulf %179, %178 : vector<8x32xf32>
    %cst_63 = arith.constant 5.000000e-01 : f32
    %181 = vector.broadcast %cst_63 : f32 to vector<8x32xf32>
    %182 = arith.addf %180, %181 : vector<8x32xf32>
    %183 = arith.mulf %172, %149 : vector<8x32xf32>
    %184 = arith.mulf %164, %174 : vector<8x32xf32>
    %185 = arith.addf %183, %184 : vector<8x32xf32>
    %186 = math.tanh %185 : vector<8x32xf32>
    %187 = arith.mulf %182, %186 : vector<8x32xf32>
    %c32 = arith.constant 32 : index
    %c0_64 = arith.constant 0 : index
    %188 = vector.load %arg10[%c32, %c0_64] : memref<64x32xf32, #tpu.memory_space<vmem>>, vector<8x32xf32>
    tpu.vector_store %arg10[%c32, %c0_64], %187 {strides = array<i32>} : memref<64x32xf32, #tpu.memory_space<vmem>>, vector<8x32xf32>,
    %189 = vector.extract_strided_slice %6 {offsets = [40, 0], sizes = [8, 128], strides = [1, 1]} : vector<64x128xf32> to vector<8x128xf32>
    %cst_65 = arith.constant dense<0.000000e+00> : vector<8x128xf32>
    %190 = tpu.matmul %187, %1, %cst_65 {dimension_numbers = #tpu.dot_dimension_numbers<[1], [0], [0], [1], [0, 0, 1, 1], [], []>} : vector<8x32xf32>, vector<32x128xf32>, vector<8x128xf32> -> vector<8x128xf32>
    %191 = arith.addf %189, %190 : vector<8x128xf32>
    %192 = arith.addf %191, %4 : vector<8x128xf32>
    %193 = vector.extract_strided_slice %192 {offsets = [0, 0], sizes = [8, 32], strides = [1, 1]} : vector<8x128xf32> to vector<8x32xf32>
    %cst_66 = arith.constant 5.000000e-01 : f32
    %194 = vector.broadcast %cst_66 : f32 to vector<8x32xf32>
    %195 = arith.mulf %194, %193 : vector<8x32xf32>
    %196 = math.tanh %195 : vector<8x32xf32>
    %cst_67 = arith.constant 5.000000e-01 : f32
    %197 = vector.broadcast %cst_67 : f32 to vector<8x32xf32>
    %198 = arith.mulf %197, %196 : vector<8x32xf32>
    %cst_68 = arith.constant 5.000000e-01 : f32
    %199 = vector.broadcast %cst_68 : f32 to vector<8x32xf32>
    %200 = arith.addf %198, %199 : vector<8x32xf32>
    %201 = vector.extract_strided_slice %192 {offsets = [0, 32], sizes = [8, 32], strides = [1, 1]} : vector<8x128xf32> to vector<8x32xf32>
    %cst_69 = arith.constant 5.000000e-01 : f32
    %202 = vector.broadcast %cst_69 : f32 to vector<8x32xf32>
    %203 = arith.mulf %202, %201 : vector<8x32xf32>
    %204 = math.tanh %203 : vector<8x32xf32>
    %cst_70 = arith.constant 5.000000e-01 : f32
    %205 = vector.broadcast %cst_70 : f32 to vector<8x32xf32>
    %206 = arith.mulf %205, %204 : vector<8x32xf32>
    %cst_71 = arith.constant 5.000000e-01 : f32
    %207 = vector.broadcast %cst_71 : f32 to vector<8x32xf32>
    %208 = arith.addf %206, %207 : vector<8x32xf32>
    %209 = vector.extract_strided_slice %192 {offsets = [0, 64], sizes = [8, 32], strides = [1, 1]} : vector<8x128xf32> to vector<8x32xf32>
    %210 = math.tanh %209 : vector<8x32xf32>
    %211 = vector.extract_strided_slice %192 {offsets = [0, 96], sizes = [8, 32], strides = [1, 1]} : vector<8x128xf32> to vector<8x32xf32>
    %cst_72 = arith.constant 5.000000e-01 : f32
    %212 = vector.broadcast %cst_72 : f32 to vector<8x32xf32>
    %213 = arith.mulf %212, %211 : vector<8x32xf32>
    %214 = math.tanh %213 : vector<8x32xf32>
    %cst_73 = arith.constant 5.000000e-01 : f32
    %215 = vector.broadcast %cst_73 : f32 to vector<8x32xf32>
    %216 = arith.mulf %215, %214 : vector<8x32xf32>
    %cst_74 = arith.constant 5.000000e-01 : f32
    %217 = vector.broadcast %cst_74 : f32 to vector<8x32xf32>
    %218 = arith.addf %216, %217 : vector<8x32xf32>
    %219 = arith.mulf %208, %185 : vector<8x32xf32>
    %220 = arith.mulf %200, %210 : vector<8x32xf32>
    %221 = arith.addf %219, %220 : vector<8x32xf32>
    %222 = math.tanh %221 : vector<8x32xf32>
    %223 = arith.mulf %218, %222 : vector<8x32xf32>
    %c40 = arith.constant 40 : index
    %c0_75 = arith.constant 0 : index
    %224 = vector.load %arg10[%c40, %c0_75] : memref<64x32xf32, #tpu.memory_space<vmem>>, vector<8x32xf32>
    tpu.vector_store %arg10[%c40, %c0_75], %223 {strides = array<i32>} : memref<64x32xf32, #tpu.memory_space<vmem>>, vector<8x32xf32>,
    %225 = vector.extract_strided_slice %6 {offsets = [48, 0], sizes = [8, 128], strides = [1, 1]} : vector<64x128xf32> to vector<8x128xf32>
    %cst_76 = arith.constant dense<0.000000e+00> : vector<8x128xf32>
    %226 = tpu.matmul %223, %1, %cst_76 {dimension_numbers = #tpu.dot_dimension_numbers<[1], [0], [0], [1], [0, 0, 1, 1], [], []>} : vector<8x32xf32>, vector<32x128xf32>, vector<8x128xf32> -> vector<8x128xf32>
    %227 = arith.addf %225, %226 : vector<8x128xf32>
    %228 = arith.addf %227, %4 : vector<8x128xf32>
    %229 = vector.extract_strided_slice %228 {offsets = [0, 0], sizes = [8, 32], strides = [1, 1]} : vector<8x128xf32> to vector<8x32xf32>
    %cst_77 = arith.constant 5.000000e-01 : f32
    %230 = vector.broadcast %cst_77 : f32 to vector<8x32xf32>
    %231 = arith.mulf %230, %229 : vector<8x32xf32>
    %232 = math.tanh %231 : vector<8x32xf32>
    %cst_78 = arith.constant 5.000000e-01 : f32
    %233 = vector.broadcast %cst_78 : f32 to vector<8x32xf32>
    %234 = arith.mulf %233, %232 : vector<8x32xf32>
    %cst_79 = arith.constant 5.000000e-01 : f32
    %235 = vector.broadcast %cst_79 : f32 to vector<8x32xf32>
    %236 = arith.addf %234, %235 : vector<8x32xf32>
    %237 = vector.extract_strided_slice %228 {offsets = [0, 32], sizes = [8, 32], strides = [1, 1]} : vector<8x128xf32> to vector<8x32xf32>
    %cst_80 = arith.constant 5.000000e-01 : f32
    %238 = vector.broadcast %cst_80 : f32 to vector<8x32xf32>
    %239 = arith.mulf %238, %237 : vector<8x32xf32>
    %240 = math.tanh %239 : vector<8x32xf32>
    %cst_81 = arith.constant 5.000000e-01 : f32
    %241 = vector.broadcast %cst_81 : f32 to vector<8x32xf32>
    %242 = arith.mulf %241, %240 : vector<8x32xf32>
    %cst_82 = arith.constant 5.000000e-01 : f32
    %243 = vector.broadcast %cst_82 : f32 to vector<8x32xf32>
    %244 = arith.addf %242, %243 : vector<8x32xf32>
    %245 = vector.extract_strided_slice %228 {offsets = [0, 64], sizes = [8, 32], strides = [1, 1]} : vector<8x128xf32> to vector<8x32xf32>
    %246 = math.tanh %245 : vector<8x32xf32>
    %247 = vector.extract_strided_slice %228 {offsets = [0, 96], sizes = [8, 32], strides = [1, 1]} : vector<8x128xf32> to vector<8x32xf32>
    %cst_83 = arith.constant 5.000000e-01 : f32
    %248 = vector.broadcast %cst_83 : f32 to vector<8x32xf32>
    %249 = arith.mulf %248, %247 : vector<8x32xf32>
    %250 = math.tanh %249 : vector<8x32xf32>
    %cst_84 = arith.constant 5.000000e-01 : f32
    %251 = vector.broadcast %cst_84 : f32 to vector<8x32xf32>
    %252 = arith.mulf %251, %250 : vector<8x32xf32>
    %cst_85 = arith.constant 5.000000e-01 : f32
    %253 = vector.broadcast %cst_85 : f32 to vector<8x32xf32>
    %254 = arith.addf %252, %253 : vector<8x32xf32>
    %255 = arith.mulf %244, %221 : vector<8x32xf32>
    %256 = arith.mulf %236, %246 : vector<8x32xf32>
    %257 = arith.addf %255, %256 : vector<8x32xf32>
    %258 = math.tanh %257 : vector<8x32xf32>
    %259 = arith.mulf %254, %258 : vector<8x32xf32>
    %c48 = arith.constant 48 : index
    %c0_86 = arith.constant 0 : index
    %260 = vector.load %arg10[%c48, %c0_86] : memref<64x32xf32, #tpu.memory_space<vmem>>, vector<8x32xf32>
    tpu.vector_store %arg10[%c48, %c0_86], %259 {strides = array<i32>} : memref<64x32xf32, #tpu.memory_space<vmem>>, vector<8x32xf32>,
    %261 = vector.extract_strided_slice %6 {offsets = [56, 0], sizes = [8, 128], strides = [1, 1]} : vector<64x128xf32> to vector<8x128xf32>
    %cst_87 = arith.constant dense<0.000000e+00> : vector<8x128xf32>
    %262 = tpu.matmul %259, %1, %cst_87 {dimension_numbers = #tpu.dot_dimension_numbers<[1], [0], [0], [1], [0, 0, 1, 1], [], []>} : vector<8x32xf32>, vector<32x128xf32>, vector<8x128xf32> -> vector<8x128xf32>
    %263 = arith.addf %261, %262 : vector<8x128xf32>
    %264 = arith.addf %263, %4 : vector<8x128xf32>
    %265 = vector.extract_strided_slice %264 {offsets = [0, 0], sizes = [8, 32], strides = [1, 1]} : vector<8x128xf32> to vector<8x32xf32>
    %cst_88 = arith.constant 5.000000e-01 : f32
    %266 = vector.broadcast %cst_88 : f32 to vector<8x32xf32>
    %267 = arith.mulf %266, %265 : vector<8x32xf32>
    %268 = math.tanh %267 : vector<8x32xf32>
    %cst_89 = arith.constant 5.000000e-01 : f32
    %269 = vector.broadcast %cst_89 : f32 to vector<8x32xf32>
    %270 = arith.mulf %269, %268 : vector<8x32xf32>
    %cst_90 = arith.constant 5.000000e-01 : f32
    %271 = vector.broadcast %cst_90 : f32 to vector<8x32xf32>
    %272 = arith.addf %270, %271 : vector<8x32xf32>
    %273 = vector.extract_strided_slice %264 {offsets = [0, 32], sizes = [8, 32], strides = [1, 1]} : vector<8x128xf32> to vector<8x32xf32>
    %cst_91 = arith.constant 5.000000e-01 : f32
    %274 = vector.broadcast %cst_91 : f32 to vector<8x32xf32>
    %275 = arith.mulf %274, %273 : vector<8x32xf32>
    %276 = math.tanh %275 : vector<8x32xf32>
    %cst_92 = arith.constant 5.000000e-01 : f32
    %277 = vector.broadcast %cst_92 : f32 to vector<8x32xf32>
    %278 = arith.mulf %277, %276 : vector<8x32xf32>
    %cst_93 = arith.constant 5.000000e-01 : f32
    %279 = vector.broadcast %cst_93 : f32 to vector<8x32xf32>
    %280 = arith.addf %278, %279 : vector<8x32xf32>
    %281 = vector.extract_strided_slice %264 {offsets = [0, 64], sizes = [8, 32], strides = [1, 1]} : vector<8x128xf32> to vector<8x32xf32>
    %282 = math.tanh %281 : vector<8x32xf32>
    %283 = vector.extract_strided_slice %264 {offsets = [0, 96], sizes = [8, 32], strides = [1, 1]} : vector<8x128xf32> to vector<8x32xf32>
    %cst_94 = arith.constant 5.000000e-01 : f32
    %284 = vector.broadcast %cst_94 : f32 to vector<8x32xf32>
    %285 = arith.mulf %284, %283 : vector<8x32xf32>
    %286 = math.tanh %285 : vector<8x32xf32>
    %cst_95 = arith.constant 5.000000e-01 : f32
    %287 = vector.broadcast %cst_95 : f32 to vector<8x32xf32>
    %288 = arith.mulf %287, %286 : vector<8x32xf32>
    %cst_96 = arith.constant 5.000000e-01 : f32
    %289 = vector.broadcast %cst_96 : f32 to vector<8x32xf32>
    %290 = arith.addf %288, %289 : vector<8x32xf32>
    %291 = arith.mulf %280, %257 : vector<8x32xf32>
    %292 = arith.mulf %272, %282 : vector<8x32xf32>
    %293 = arith.addf %291, %292 : vector<8x32xf32>
    %294 = math.tanh %293 : vector<8x32xf32>
    %295 = arith.mulf %290, %294 : vector<8x32xf32>
    %c56 = arith.constant 56 : index
    %c0_97 = arith.constant 0 : index
    %296 = vector.load %arg10[%c56, %c0_97] : memref<64x32xf32, #tpu.memory_space<vmem>>, vector<8x32xf32>
    tpu.vector_store %arg10[%c56, %c0_97], %295 {strides = array<i32>} : memref<64x32xf32, #tpu.memory_space<vmem>>, vector<8x32xf32>,
    %c0_98 = arith.constant 0 : index
    %c0_99 = arith.constant 0 : index
    %297 = vector.load %arg10[%c0_98, %c0_99] : memref<64x32xf32, #tpu.memory_space<vmem>>, vector<64x32xf32>
    %c0_100 = arith.constant 0 : index
    %c0_101 = arith.constant 0 : index
    %298 = vector.load %arg5[%c0_100, %c0_101] : memref<32x128xf32, #tpu.memory_space<vmem>>, vector<32x128xf32>
    %c0_102 = arith.constant 0 : index
    %c0_103 = arith.constant 0 : index
    %299 = vector.load %arg6[%c0_102, %c0_103] : memref<1x128xf32, #tpu.memory_space<vmem>>, vector<1x128xf32>
    %300 = vector.shape_cast %299 : vector<1x128xf32> to vector<1x128xf32>
    %301 = vector.broadcast %300 : vector<1x128xf32> to vector<8x128xf32>
    %c0_104 = arith.constant 0 : index
    %c0_105 = arith.constant 0 : index
    %302 = vector.load %arg4[%c0_104, %c0_105] : memref<32x128xf32, #tpu.memory_space<vmem>>, vector<32x128xf32>
    %cst_106 = arith.constant dense<0.000000e+00> : vector<64x128xf32>
    %303 = tpu.matmul %297, %302, %cst_106 {dimension_numbers = #tpu.dot_dimension_numbers<[1], [0], [0], [1], [0, 0, 1, 1], [], []>} : vector<64x32xf32>, vector<32x128xf32>, vector<64x128xf32> -> vector<64x128xf32>
    %cst_107 = arith.constant 0.000000e+00 : f32
    %304 = vector.broadcast %cst_107 : f32 to vector<8x32xf32>
    %cst_108 = arith.constant 0.000000e+00 : f32
    %305 = vector.broadcast %cst_108 : f32 to vector<8x32xf32>
    %306 = vector.extract_strided_slice %303 {offsets = [0, 0], sizes = [8, 128], strides = [1, 1]} : vector<64x128xf32> to vector<8x128xf32>
    %cst_109 = arith.constant dense<0.000000e+00> : vector<8x128xf32>
    %307 = tpu.matmul %304, %298, %cst_109 {dimension_numbers = #tpu.dot_dimension_numbers<[1], [0], [0], [1], [0, 0, 1, 1], [], []>} : vector<8x32xf32>, vector<32x128xf32>, vector<8x128xf32> -> vector<8x128xf32>
    %308 = arith.addf %306, %307 : vector<8x128xf32>
    %309 = arith.addf %308, %301 : vector<8x128xf32>
    %310 = vector.extract_strided_slice %309 {offsets = [0, 0], sizes = [8, 32], strides = [1, 1]} : vector<8x128xf32> to vector<8x32xf32>
    %cst_110 = arith.constant 5.000000e-01 : f32
    %311 = vector.broadcast %cst_110 : f32 to vector<8x32xf32>
    %312 = arith.mulf %311, %310 : vector<8x32xf32>
    %313 = math.tanh %312 : vector<8x32xf32>
    %cst_111 = arith.constant 5.000000e-01 : f32
    %314 = vector.broadcast %cst_111 : f32 to vector<8x32xf32>
    %315 = arith.mulf %314, %313 : vector<8x32xf32>
    %cst_112 = arith.constant 5.000000e-01 : f32
    %316 = vector.broadcast %cst_112 : f32 to vector<8x32xf32>
    %317 = arith.addf %315, %316 : vector<8x32xf32>
    %318 = vector.extract_strided_slice %309 {offsets = [0, 32], sizes = [8, 32], strides = [1, 1]} : vector<8x128xf32> to vector<8x32xf32>
    %cst_113 = arith.constant 5.000000e-01 : f32
    %319 = vector.broadcast %cst_113 : f32 to vector<8x32xf32>
    %320 = arith.mulf %319, %318 : vector<8x32xf32>
    %321 = math.tanh %320 : vector<8x32xf32>
    %cst_114 = arith.constant 5.000000e-01 : f32
    %322 = vector.broadcast %cst_114 : f32 to vector<8x32xf32>
    %323 = arith.mulf %322, %321 : vector<8x32xf32>
    %cst_115 = arith.constant 5.000000e-01 : f32
    %324 = vector.broadcast %cst_115 : f32 to vector<8x32xf32>
    %325 = arith.addf %323, %324 : vector<8x32xf32>
    %326 = vector.extract_strided_slice %309 {offsets = [0, 64], sizes = [8, 32], strides = [1, 1]} : vector<8x128xf32> to vector<8x32xf32>
    %327 = math.tanh %326 : vector<8x32xf32>
    %328 = vector.extract_strided_slice %309 {offsets = [0, 96], sizes = [8, 32], strides = [1, 1]} : vector<8x128xf32> to vector<8x32xf32>
    %cst_116 = arith.constant 5.000000e-01 : f32
    %329 = vector.broadcast %cst_116 : f32 to vector<8x32xf32>
    %330 = arith.mulf %329, %328 : vector<8x32xf32>
    %331 = math.tanh %330 : vector<8x32xf32>
    %cst_117 = arith.constant 5.000000e-01 : f32
    %332 = vector.broadcast %cst_117 : f32 to vector<8x32xf32>
    %333 = arith.mulf %332, %331 : vector<8x32xf32>
    %cst_118 = arith.constant 5.000000e-01 : f32
    %334 = vector.broadcast %cst_118 : f32 to vector<8x32xf32>
    %335 = arith.addf %333, %334 : vector<8x32xf32>
    %336 = arith.mulf %325, %305 : vector<8x32xf32>
    %337 = arith.mulf %317, %327 : vector<8x32xf32>
    %338 = arith.addf %336, %337 : vector<8x32xf32>
    %339 = math.tanh %338 : vector<8x32xf32>
    %340 = arith.mulf %335, %339 : vector<8x32xf32>
    %c0_119 = arith.constant 0 : index
    %c0_120 = arith.constant 0 : index
    %341 = vector.load %arg10[%c0_119, %c0_120] : memref<64x32xf32, #tpu.memory_space<vmem>>, vector<8x32xf32>
    tpu.vector_store %arg10[%c0_119, %c0_120], %340 {strides = array<i32>} : memref<64x32xf32, #tpu.memory_space<vmem>>, vector<8x32xf32>,
    %342 = vector.extract_strided_slice %303 {offsets = [8, 0], sizes = [8, 128], strides = [1, 1]} : vector<64x128xf32> to vector<8x128xf32>
    %cst_121 = arith.constant dense<0.000000e+00> : vector<8x128xf32>
    %343 = tpu.matmul %340, %298, %cst_121 {dimension_numbers = #tpu.dot_dimension_numbers<[1], [0], [0], [1], [0, 0, 1, 1], [], []>} : vector<8x32xf32>, vector<32x128xf32>, vector<8x128xf32> -> vector<8x128xf32>
    %344 = arith.addf %342, %343 : vector<8x128xf32>
    %345 = arith.addf %344, %301 : vector<8x128xf32>
    %346 = vector.extract_strided_slice %345 {offsets = [0, 0], sizes = [8, 32], strides = [1, 1]} : vector<8x128xf32> to vector<8x32xf32>
    %cst_122 = arith.constant 5.000000e-01 : f32
    %347 = vector.broadcast %cst_122 : f32 to vector<8x32xf32>
    %348 = arith.mulf %347, %346 : vector<8x32xf32>
    %349 = math.tanh %348 : vector<8x32xf32>
    %cst_123 = arith.constant 5.000000e-01 : f32
    %350 = vector.broadcast %cst_123 : f32 to vector<8x32xf32>
    %351 = arith.mulf %350, %349 : vector<8x32xf32>
    %cst_124 = arith.constant 5.000000e-01 : f32
    %352 = vector.broadcast %cst_124 : f32 to vector<8x32xf32>
    %353 = arith.addf %351, %352 : vector<8x32xf32>
    %354 = vector.extract_strided_slice %345 {offsets = [0, 32], sizes = [8, 32], strides = [1, 1]} : vector<8x128xf32> to vector<8x32xf32>
    %cst_125 = arith.constant 5.000000e-01 : f32
    %355 = vector.broadcast %cst_125 : f32 to vector<8x32xf32>
    %356 = arith.mulf %355, %354 : vector<8x32xf32>
    %357 = math.tanh %356 : vector<8x32xf32>
    %cst_126 = arith.constant 5.000000e-01 : f32
    %358 = vector.broadcast %cst_126 : f32 to vector<8x32xf32>
    %359 = arith.mulf %358, %357 : vector<8x32xf32>
    %cst_127 = arith.constant 5.000000e-01 : f32
    %360 = vector.broadcast %cst_127 : f32 to vector<8x32xf32>
    %361 = arith.addf %359, %360 : vector<8x32xf32>
    %362 = vector.extract_strided_slice %345 {offsets = [0, 64], sizes = [8, 32], strides = [1, 1]} : vector<8x128xf32> to vector<8x32xf32>
    %363 = math.tanh %362 : vector<8x32xf32>
    %364 = vector.extract_strided_slice %345 {offsets = [0, 96], sizes = [8, 32], strides = [1, 1]} : vector<8x128xf32> to vector<8x32xf32>
    %cst_128 = arith.constant 5.000000e-01 : f32
    %365 = vector.broadcast %cst_128 : f32 to vector<8x32xf32>
    %366 = arith.mulf %365, %364 : vector<8x32xf32>
    %367 = math.tanh %366 : vector<8x32xf32>
    %cst_129 = arith.constant 5.000000e-01 : f32
    %368 = vector.broadcast %cst_129 : f32 to vector<8x32xf32>
    %369 = arith.mulf %368, %367 : vector<8x32xf32>
    %cst_130 = arith.constant 5.000000e-01 : f32
    %370 = vector.broadcast %cst_130 : f32 to vector<8x32xf32>
    %371 = arith.addf %369, %370 : vector<8x32xf32>
    %372 = arith.mulf %361, %338 : vector<8x32xf32>
    %373 = arith.mulf %353, %363 : vector<8x32xf32>
    %374 = arith.addf %372, %373 : vector<8x32xf32>
    %375 = math.tanh %374 : vector<8x32xf32>
    %376 = arith.mulf %371, %375 : vector<8x32xf32>
    %c8_131 = arith.constant 8 : index
    %c0_132 = arith.constant 0 : index
    %377 = vector.load %arg10[%c8_131, %c0_132] : memref<64x32xf32, #tpu.memory_space<vmem>>, vector<8x32xf32>
    tpu.vector_store %arg10[%c8_131, %c0_132], %376 {strides = array<i32>} : memref<64x32xf32, #tpu.memory_space<vmem>>, vector<8x32xf32>,
    %378 = vector.extract_strided_slice %303 {offsets = [16, 0], sizes = [8, 128], strides = [1, 1]} : vector<64x128xf32> to vector<8x128xf32>
    %cst_133 = arith.constant dense<0.000000e+00> : vector<8x128xf32>
    %379 = tpu.matmul %376, %298, %cst_133 {dimension_numbers = #tpu.dot_dimension_numbers<[1], [0], [0], [1], [0, 0, 1, 1], [], []>} : vector<8x32xf32>, vector<32x128xf32>, vector<8x128xf32> -> vector<8x128xf32>
    %380 = arith.addf %378, %379 : vector<8x128xf32>
    %381 = arith.addf %380, %301 : vector<8x128xf32>
    %382 = vector.extract_strided_slice %381 {offsets = [0, 0], sizes = [8, 32], strides = [1, 1]} : vector<8x128xf32> to vector<8x32xf32>
    %cst_134 = arith.constant 5.000000e-01 : f32
    %383 = vector.broadcast %cst_134 : f32 to vector<8x32xf32>
    %384 = arith.mulf %383, %382 : vector<8x32xf32>
    %385 = math.tanh %384 : vector<8x32xf32>
    %cst_135 = arith.constant 5.000000e-01 : f32
    %386 = vector.broadcast %cst_135 : f32 to vector<8x32xf32>
    %387 = arith.mulf %386, %385 : vector<8x32xf32>
    %cst_136 = arith.constant 5.000000e-01 : f32
    %388 = vector.broadcast %cst_136 : f32 to vector<8x32xf32>
    %389 = arith.addf %387, %388 : vector<8x32xf32>
    %390 = vector.extract_strided_slice %381 {offsets = [0, 32], sizes = [8, 32], strides = [1, 1]} : vector<8x128xf32> to vector<8x32xf32>
    %cst_137 = arith.constant 5.000000e-01 : f32
    %391 = vector.broadcast %cst_137 : f32 to vector<8x32xf32>
    %392 = arith.mulf %391, %390 : vector<8x32xf32>
    %393 = math.tanh %392 : vector<8x32xf32>
    %cst_138 = arith.constant 5.000000e-01 : f32
    %394 = vector.broadcast %cst_138 : f32 to vector<8x32xf32>
    %395 = arith.mulf %394, %393 : vector<8x32xf32>
    %cst_139 = arith.constant 5.000000e-01 : f32
    %396 = vector.broadcast %cst_139 : f32 to vector<8x32xf32>
    %397 = arith.addf %395, %396 : vector<8x32xf32>
    %398 = vector.extract_strided_slice %381 {offsets = [0, 64], sizes = [8, 32], strides = [1, 1]} : vector<8x128xf32> to vector<8x32xf32>
    %399 = math.tanh %398 : vector<8x32xf32>
    %400 = vector.extract_strided_slice %381 {offsets = [0, 96], sizes = [8, 32], strides = [1, 1]} : vector<8x128xf32> to vector<8x32xf32>
    %cst_140 = arith.constant 5.000000e-01 : f32
    %401 = vector.broadcast %cst_140 : f32 to vector<8x32xf32>
    %402 = arith.mulf %401, %400 : vector<8x32xf32>
    %403 = math.tanh %402 : vector<8x32xf32>
    %cst_141 = arith.constant 5.000000e-01 : f32
    %404 = vector.broadcast %cst_141 : f32 to vector<8x32xf32>
    %405 = arith.mulf %404, %403 : vector<8x32xf32>
    %cst_142 = arith.constant 5.000000e-01 : f32
    %406 = vector.broadcast %cst_142 : f32 to vector<8x32xf32>
    %407 = arith.addf %405, %406 : vector<8x32xf32>
    %408 = arith.mulf %397, %374 : vector<8x32xf32>
    %409 = arith.mulf %389, %399 : vector<8x32xf32>
    %410 = arith.addf %408, %409 : vector<8x32xf32>
    %411 = math.tanh %410 : vector<8x32xf32>
    %412 = arith.mulf %407, %411 : vector<8x32xf32>
    %c16_143 = arith.constant 16 : index
    %c0_144 = arith.constant 0 : index
    %413 = vector.load %arg10[%c16_143, %c0_144] : memref<64x32xf32, #tpu.memory_space<vmem>>, vector<8x32xf32>
    tpu.vector_store %arg10[%c16_143, %c0_144], %412 {strides = array<i32>} : memref<64x32xf32, #tpu.memory_space<vmem>>, vector<8x32xf32>,
    %414 = vector.extract_strided_slice %303 {offsets = [24, 0], sizes = [8, 128], strides = [1, 1]} : vector<64x128xf32> to vector<8x128xf32>
    %cst_145 = arith.constant dense<0.000000e+00> : vector<8x128xf32>
    %415 = tpu.matmul %412, %298, %cst_145 {dimension_numbers = #tpu.dot_dimension_numbers<[1], [0], [0], [1], [0, 0, 1, 1], [], []>} : vector<8x32xf32>, vector<32x128xf32>, vector<8x128xf32> -> vector<8x128xf32>
    %416 = arith.addf %414, %415 : vector<8x128xf32>
    %417 = arith.addf %416, %301 : vector<8x128xf32>
    %418 = vector.extract_strided_slice %417 {offsets = [0, 0], sizes = [8, 32], strides = [1, 1]} : vector<8x128xf32> to vector<8x32xf32>
    %cst_146 = arith.constant 5.000000e-01 : f32
    %419 = vector.broadcast %cst_146 : f32 to vector<8x32xf32>
    %420 = arith.mulf %419, %418 : vector<8x32xf32>
    %421 = math.tanh %420 : vector<8x32xf32>
    %cst_147 = arith.constant 5.000000e-01 : f32
    %422 = vector.broadcast %cst_147 : f32 to vector<8x32xf32>
    %423 = arith.mulf %422, %421 : vector<8x32xf32>
    %cst_148 = arith.constant 5.000000e-01 : f32
    %424 = vector.broadcast %cst_148 : f32 to vector<8x32xf32>
    %425 = arith.addf %423, %424 : vector<8x32xf32>
    %426 = vector.extract_strided_slice %417 {offsets = [0, 32], sizes = [8, 32], strides = [1, 1]} : vector<8x128xf32> to vector<8x32xf32>
    %cst_149 = arith.constant 5.000000e-01 : f32
    %427 = vector.broadcast %cst_149 : f32 to vector<8x32xf32>
    %428 = arith.mulf %427, %426 : vector<8x32xf32>
    %429 = math.tanh %428 : vector<8x32xf32>
    %cst_150 = arith.constant 5.000000e-01 : f32
    %430 = vector.broadcast %cst_150 : f32 to vector<8x32xf32>
    %431 = arith.mulf %430, %429 : vector<8x32xf32>
    %cst_151 = arith.constant 5.000000e-01 : f32
    %432 = vector.broadcast %cst_151 : f32 to vector<8x32xf32>
    %433 = arith.addf %431, %432 : vector<8x32xf32>
    %434 = vector.extract_strided_slice %417 {offsets = [0, 64], sizes = [8, 32], strides = [1, 1]} : vector<8x128xf32> to vector<8x32xf32>
    %435 = math.tanh %434 : vector<8x32xf32>
    %436 = vector.extract_strided_slice %417 {offsets = [0, 96], sizes = [8, 32], strides = [1, 1]} : vector<8x128xf32> to vector<8x32xf32>
    %cst_152 = arith.constant 5.000000e-01 : f32
    %437 = vector.broadcast %cst_152 : f32 to vector<8x32xf32>
    %438 = arith.mulf %437, %436 : vector<8x32xf32>
    %439 = math.tanh %438 : vector<8x32xf32>
    %cst_153 = arith.constant 5.000000e-01 : f32
    %440 = vector.broadcast %cst_153 : f32 to vector<8x32xf32>
    %441 = arith.mulf %440, %439 : vector<8x32xf32>
    %cst_154 = arith.constant 5.000000e-01 : f32
    %442 = vector.broadcast %cst_154 : f32 to vector<8x32xf32>
    %443 = arith.addf %441, %442 : vector<8x32xf32>
    %444 = arith.mulf %433, %410 : vector<8x32xf32>
    %445 = arith.mulf %425, %435 : vector<8x32xf32>
    %446 = arith.addf %444, %445 : vector<8x32xf32>
    %447 = math.tanh %446 : vector<8x32xf32>
    %448 = arith.mulf %443, %447 : vector<8x32xf32>
    %c24_155 = arith.constant 24 : index
    %c0_156 = arith.constant 0 : index
    %449 = vector.load %arg10[%c24_155, %c0_156] : memref<64x32xf32, #tpu.memory_space<vmem>>, vector<8x32xf32>
    tpu.vector_store %arg10[%c24_155, %c0_156], %448 {strides = array<i32>} : memref<64x32xf32, #tpu.memory_space<vmem>>, vector<8x32xf32>,
    %450 = vector.extract_strided_slice %303 {offsets = [32, 0], sizes = [8, 128], strides = [1, 1]} : vector<64x128xf32> to vector<8x128xf32>
    %cst_157 = arith.constant dense<0.000000e+00> : vector<8x128xf32>
    %451 = tpu.matmul %448, %298, %cst_157 {dimension_numbers = #tpu.dot_dimension_numbers<[1], [0], [0], [1], [0, 0, 1, 1], [], []>} : vector<8x32xf32>, vector<32x128xf32>, vector<8x128xf32> -> vector<8x128xf32>
    %452 = arith.addf %450, %451 : vector<8x128xf32>
    %453 = arith.addf %452, %301 : vector<8x128xf32>
    %454 = vector.extract_strided_slice %453 {offsets = [0, 0], sizes = [8, 32], strides = [1, 1]} : vector<8x128xf32> to vector<8x32xf32>
    %cst_158 = arith.constant 5.000000e-01 : f32
    %455 = vector.broadcast %cst_158 : f32 to vector<8x32xf32>
    %456 = arith.mulf %455, %454 : vector<8x32xf32>
    %457 = math.tanh %456 : vector<8x32xf32>
    %cst_159 = arith.constant 5.000000e-01 : f32
    %458 = vector.broadcast %cst_159 : f32 to vector<8x32xf32>
    %459 = arith.mulf %458, %457 : vector<8x32xf32>
    %cst_160 = arith.constant 5.000000e-01 : f32
    %460 = vector.broadcast %cst_160 : f32 to vector<8x32xf32>
    %461 = arith.addf %459, %460 : vector<8x32xf32>
    %462 = vector.extract_strided_slice %453 {offsets = [0, 32], sizes = [8, 32], strides = [1, 1]} : vector<8x128xf32> to vector<8x32xf32>
    %cst_161 = arith.constant 5.000000e-01 : f32
    %463 = vector.broadcast %cst_161 : f32 to vector<8x32xf32>
    %464 = arith.mulf %463, %462 : vector<8x32xf32>
    %465 = math.tanh %464 : vector<8x32xf32>
    %cst_162 = arith.constant 5.000000e-01 : f32
    %466 = vector.broadcast %cst_162 : f32 to vector<8x32xf32>
    %467 = arith.mulf %466, %465 : vector<8x32xf32>
    %cst_163 = arith.constant 5.000000e-01 : f32
    %468 = vector.broadcast %cst_163 : f32 to vector<8x32xf32>
    %469 = arith.addf %467, %468 : vector<8x32xf32>
    %470 = vector.extract_strided_slice %453 {offsets = [0, 64], sizes = [8, 32], strides = [1, 1]} : vector<8x128xf32> to vector<8x32xf32>
    %471 = math.tanh %470 : vector<8x32xf32>
    %472 = vector.extract_strided_slice %453 {offsets = [0, 96], sizes = [8, 32], strides = [1, 1]} : vector<8x128xf32> to vector<8x32xf32>
    %cst_164 = arith.constant 5.000000e-01 : f32
    %473 = vector.broadcast %cst_164 : f32 to vector<8x32xf32>
    %474 = arith.mulf %473, %472 : vector<8x32xf32>
    %475 = math.tanh %474 : vector<8x32xf32>
    %cst_165 = arith.constant 5.000000e-01 : f32
    %476 = vector.broadcast %cst_165 : f32 to vector<8x32xf32>
    %477 = arith.mulf %476, %475 : vector<8x32xf32>
    %cst_166 = arith.constant 5.000000e-01 : f32
    %478 = vector.broadcast %cst_166 : f32 to vector<8x32xf32>
    %479 = arith.addf %477, %478 : vector<8x32xf32>
    %480 = arith.mulf %469, %446 : vector<8x32xf32>
    %481 = arith.mulf %461, %471 : vector<8x32xf32>
    %482 = arith.addf %480, %481 : vector<8x32xf32>
    %483 = math.tanh %482 : vector<8x32xf32>
    %484 = arith.mulf %479, %483 : vector<8x32xf32>
    %c32_167 = arith.constant 32 : index
    %c0_168 = arith.constant 0 : index
    %485 = vector.load %arg10[%c32_167, %c0_168] : memref<64x32xf32, #tpu.memory_space<vmem>>, vector<8x32xf32>
    tpu.vector_store %arg10[%c32_167, %c0_168], %484 {strides = array<i32>} : memref<64x32xf32, #tpu.memory_space<vmem>>, vector<8x32xf32>,
    %486 = vector.extract_strided_slice %303 {offsets = [40, 0], sizes = [8, 128], strides = [1, 1]} : vector<64x128xf32> to vector<8x128xf32>
    %cst_169 = arith.constant dense<0.000000e+00> : vector<8x128xf32>
    %487 = tpu.matmul %484, %298, %cst_169 {dimension_numbers = #tpu.dot_dimension_numbers<[1], [0], [0], [1], [0, 0, 1, 1], [], []>} : vector<8x32xf32>, vector<32x128xf32>, vector<8x128xf32> -> vector<8x128xf32>
    %488 = arith.addf %486, %487 : vector<8x128xf32>
    %489 = arith.addf %488, %301 : vector<8x128xf32>
    %490 = vector.extract_strided_slice %489 {offsets = [0, 0], sizes = [8, 32], strides = [1, 1]} : vector<8x128xf32> to vector<8x32xf32>
    %cst_170 = arith.constant 5.000000e-01 : f32
    %491 = vector.broadcast %cst_170 : f32 to vector<8x32xf32>
    %492 = arith.mulf %491, %490 : vector<8x32xf32>
    %493 = math.tanh %492 : vector<8x32xf32>
    %cst_171 = arith.constant 5.000000e-01 : f32
    %494 = vector.broadcast %cst_171 : f32 to vector<8x32xf32>
    %495 = arith.mulf %494, %493 : vector<8x32xf32>
    %cst_172 = arith.constant 5.000000e-01 : f32
    %496 = vector.broadcast %cst_172 : f32 to vector<8x32xf32>
    %497 = arith.addf %495, %496 : vector<8x32xf32>
    %498 = vector.extract_strided_slice %489 {offsets = [0, 32], sizes = [8, 32], strides = [1, 1]} : vector<8x128xf32> to vector<8x32xf32>
    %cst_173 = arith.constant 5.000000e-01 : f32
    %499 = vector.broadcast %cst_173 : f32 to vector<8x32xf32>
    %500 = arith.mulf %499, %498 : vector<8x32xf32>
    %501 = math.tanh %500 : vector<8x32xf32>
    %cst_174 = arith.constant 5.000000e-01 : f32
    %502 = vector.broadcast %cst_174 : f32 to vector<8x32xf32>
    %503 = arith.mulf %502, %501 : vector<8x32xf32>
    %cst_175 = arith.constant 5.000000e-01 : f32
    %504 = vector.broadcast %cst_175 : f32 to vector<8x32xf32>
    %505 = arith.addf %503, %504 : vector<8x32xf32>
    %506 = vector.extract_strided_slice %489 {offsets = [0, 64], sizes = [8, 32], strides = [1, 1]} : vector<8x128xf32> to vector<8x32xf32>
    %507 = math.tanh %506 : vector<8x32xf32>
    %508 = vector.extract_strided_slice %489 {offsets = [0, 96], sizes = [8, 32], strides = [1, 1]} : vector<8x128xf32> to vector<8x32xf32>
    %cst_176 = arith.constant 5.000000e-01 : f32
    %509 = vector.broadcast %cst_176 : f32 to vector<8x32xf32>
    %510 = arith.mulf %509, %508 : vector<8x32xf32>
    %511 = math.tanh %510 : vector<8x32xf32>
    %cst_177 = arith.constant 5.000000e-01 : f32
    %512 = vector.broadcast %cst_177 : f32 to vector<8x32xf32>
    %513 = arith.mulf %512, %511 : vector<8x32xf32>
    %cst_178 = arith.constant 5.000000e-01 : f32
    %514 = vector.broadcast %cst_178 : f32 to vector<8x32xf32>
    %515 = arith.addf %513, %514 : vector<8x32xf32>
    %516 = arith.mulf %505, %482 : vector<8x32xf32>
    %517 = arith.mulf %497, %507 : vector<8x32xf32>
    %518 = arith.addf %516, %517 : vector<8x32xf32>
    %519 = math.tanh %518 : vector<8x32xf32>
    %520 = arith.mulf %515, %519 : vector<8x32xf32>
    %c40_179 = arith.constant 40 : index
    %c0_180 = arith.constant 0 : index
    %521 = vector.load %arg10[%c40_179, %c0_180] : memref<64x32xf32, #tpu.memory_space<vmem>>, vector<8x32xf32>
    tpu.vector_store %arg10[%c40_179, %c0_180], %520 {strides = array<i32>} : memref<64x32xf32, #tpu.memory_space<vmem>>, vector<8x32xf32>,
    %522 = vector.extract_strided_slice %303 {offsets = [48, 0], sizes = [8, 128], strides = [1, 1]} : vector<64x128xf32> to vector<8x128xf32>
    %cst_181 = arith.constant dense<0.000000e+00> : vector<8x128xf32>
    %523 = tpu.matmul %520, %298, %cst_181 {dimension_numbers = #tpu.dot_dimension_numbers<[1], [0], [0], [1], [0, 0, 1, 1], [], []>} : vector<8x32xf32>, vector<32x128xf32>, vector<8x128xf32> -> vector<8x128xf32>
    %524 = arith.addf %522, %523 : vector<8x128xf32>
    %525 = arith.addf %524, %301 : vector<8x128xf32>
    %526 = vector.extract_strided_slice %525 {offsets = [0, 0], sizes = [8, 32], strides = [1, 1]} : vector<8x128xf32> to vector<8x32xf32>
    %cst_182 = arith.constant 5.000000e-01 : f32
    %527 = vector.broadcast %cst_182 : f32 to vector<8x32xf32>
    %528 = arith.mulf %527, %526 : vector<8x32xf32>
    %529 = math.tanh %528 : vector<8x32xf32>
    %cst_183 = arith.constant 5.000000e-01 : f32
    %530 = vector.broadcast %cst_183 : f32 to vector<8x32xf32>
    %531 = arith.mulf %530, %529 : vector<8x32xf32>
    %cst_184 = arith.constant 5.000000e-01 : f32
    %532 = vector.broadcast %cst_184 : f32 to vector<8x32xf32>
    %533 = arith.addf %531, %532 : vector<8x32xf32>
    %534 = vector.extract_strided_slice %525 {offsets = [0, 32], sizes = [8, 32], strides = [1, 1]} : vector<8x128xf32> to vector<8x32xf32>
    %cst_185 = arith.constant 5.000000e-01 : f32
    %535 = vector.broadcast %cst_185 : f32 to vector<8x32xf32>
    %536 = arith.mulf %535, %534 : vector<8x32xf32>
    %537 = math.tanh %536 : vector<8x32xf32>
    %cst_186 = arith.constant 5.000000e-01 : f32
    %538 = vector.broadcast %cst_186 : f32 to vector<8x32xf32>
    %539 = arith.mulf %538, %537 : vector<8x32xf32>
    %cst_187 = arith.constant 5.000000e-01 : f32
    %540 = vector.broadcast %cst_187 : f32 to vector<8x32xf32>
    %541 = arith.addf %539, %540 : vector<8x32xf32>
    %542 = vector.extract_strided_slice %525 {offsets = [0, 64], sizes = [8, 32], strides = [1, 1]} : vector<8x128xf32> to vector<8x32xf32>
    %543 = math.tanh %542 : vector<8x32xf32>
    %544 = vector.extract_strided_slice %525 {offsets = [0, 96], sizes = [8, 32], strides = [1, 1]} : vector<8x128xf32> to vector<8x32xf32>
    %cst_188 = arith.constant 5.000000e-01 : f32
    %545 = vector.broadcast %cst_188 : f32 to vector<8x32xf32>
    %546 = arith.mulf %545, %544 : vector<8x32xf32>
    %547 = math.tanh %546 : vector<8x32xf32>
    %cst_189 = arith.constant 5.000000e-01 : f32
    %548 = vector.broadcast %cst_189 : f32 to vector<8x32xf32>
    %549 = arith.mulf %548, %547 : vector<8x32xf32>
    %cst_190 = arith.constant 5.000000e-01 : f32
    %550 = vector.broadcast %cst_190 : f32 to vector<8x32xf32>
    %551 = arith.addf %549, %550 : vector<8x32xf32>
    %552 = arith.mulf %541, %518 : vector<8x32xf32>
    %553 = arith.mulf %533, %543 : vector<8x32xf32>
    %554 = arith.addf %552, %553 : vector<8x32xf32>
    %555 = math.tanh %554 : vector<8x32xf32>
    %556 = arith.mulf %551, %555 : vector<8x32xf32>
    %c48_191 = arith.constant 48 : index
    %c0_192 = arith.constant 0 : index
    %557 = vector.load %arg10[%c48_191, %c0_192] : memref<64x32xf32, #tpu.memory_space<vmem>>, vector<8x32xf32>
    tpu.vector_store %arg10[%c48_191, %c0_192], %556 {strides = array<i32>} : memref<64x32xf32, #tpu.memory_space<vmem>>, vector<8x32xf32>,
    %558 = vector.extract_strided_slice %303 {offsets = [56, 0], sizes = [8, 128], strides = [1, 1]} : vector<64x128xf32> to vector<8x128xf32>
    %cst_193 = arith.constant dense<0.000000e+00> : vector<8x128xf32>
    %559 = tpu.matmul %556, %298, %cst_193 {dimension_numbers = #tpu.dot_dimension_numbers<[1], [0], [0], [1], [0, 0, 1, 1], [], []>} : vector<8x32xf32>, vector<32x128xf32>, vector<8x128xf32> -> vector<8x128xf32>
    %560 = arith.addf %558, %559 : vector<8x128xf32>
    %561 = arith.addf %560, %301 : vector<8x128xf32>
    %562 = vector.extract_strided_slice %561 {offsets = [0, 0], sizes = [8, 32], strides = [1, 1]} : vector<8x128xf32> to vector<8x32xf32>
    %cst_194 = arith.constant 5.000000e-01 : f32
    %563 = vector.broadcast %cst_194 : f32 to vector<8x32xf32>
    %564 = arith.mulf %563, %562 : vector<8x32xf32>
    %565 = math.tanh %564 : vector<8x32xf32>
    %cst_195 = arith.constant 5.000000e-01 : f32
    %566 = vector.broadcast %cst_195 : f32 to vector<8x32xf32>
    %567 = arith.mulf %566, %565 : vector<8x32xf32>
    %cst_196 = arith.constant 5.000000e-01 : f32
    %568 = vector.broadcast %cst_196 : f32 to vector<8x32xf32>
    %569 = arith.addf %567, %568 : vector<8x32xf32>
    %570 = vector.extract_strided_slice %561 {offsets = [0, 32], sizes = [8, 32], strides = [1, 1]} : vector<8x128xf32> to vector<8x32xf32>
    %cst_197 = arith.constant 5.000000e-01 : f32
    %571 = vector.broadcast %cst_197 : f32 to vector<8x32xf32>
    %572 = arith.mulf %571, %570 : vector<8x32xf32>
    %573 = math.tanh %572 : vector<8x32xf32>
    %cst_198 = arith.constant 5.000000e-01 : f32
    %574 = vector.broadcast %cst_198 : f32 to vector<8x32xf32>
    %575 = arith.mulf %574, %573 : vector<8x32xf32>
    %cst_199 = arith.constant 5.000000e-01 : f32
    %576 = vector.broadcast %cst_199 : f32 to vector<8x32xf32>
    %577 = arith.addf %575, %576 : vector<8x32xf32>
    %578 = vector.extract_strided_slice %561 {offsets = [0, 64], sizes = [8, 32], strides = [1, 1]} : vector<8x128xf32> to vector<8x32xf32>
    %579 = math.tanh %578 : vector<8x32xf32>
    %580 = vector.extract_strided_slice %561 {offsets = [0, 96], sizes = [8, 32], strides = [1, 1]} : vector<8x128xf32> to vector<8x32xf32>
    %cst_200 = arith.constant 5.000000e-01 : f32
    %581 = vector.broadcast %cst_200 : f32 to vector<8x32xf32>
    %582 = arith.mulf %581, %580 : vector<8x32xf32>
    %583 = math.tanh %582 : vector<8x32xf32>
    %cst_201 = arith.constant 5.000000e-01 : f32
    %584 = vector.broadcast %cst_201 : f32 to vector<8x32xf32>
    %585 = arith.mulf %584, %583 : vector<8x32xf32>
    %cst_202 = arith.constant 5.000000e-01 : f32
    %586 = vector.broadcast %cst_202 : f32 to vector<8x32xf32>
    %587 = arith.addf %585, %586 : vector<8x32xf32>
    %588 = arith.mulf %577, %554 : vector<8x32xf32>
    %589 = arith.mulf %569, %579 : vector<8x32xf32>
    %590 = arith.addf %588, %589 : vector<8x32xf32>
    %591 = math.tanh %590 : vector<8x32xf32>
    %592 = arith.mulf %587, %591 : vector<8x32xf32>
    %c56_203 = arith.constant 56 : index
    %c0_204 = arith.constant 0 : index
    %593 = vector.load %arg10[%c56_203, %c0_204] : memref<64x32xf32, #tpu.memory_space<vmem>>, vector<8x32xf32>
    tpu.vector_store %arg10[%c56_203, %c0_204], %592 {strides = array<i32>} : memref<64x32xf32, #tpu.memory_space<vmem>>, vector<8x32xf32>,
    %c0_205 = arith.constant 0 : index
    %c0_206 = arith.constant 0 : index
    %594 = vector.load %arg10[%c0_205, %c0_206] : memref<64x32xf32, #tpu.memory_space<vmem>>, vector<64x32xf32>
    %c0_207 = arith.constant 0 : index
    %c0_208 = arith.constant 0 : index
    %595 = vector.load %arg7[%c0_207, %c0_208] : memref<32x1xf32, #tpu.memory_space<vmem>>, vector<32x1xf32>
    %cst_209 = arith.constant dense<0.000000e+00> : vector<64x1xf32>
    %596 = tpu.matmul %594, %595, %cst_209 {dimension_numbers = #tpu.dot_dimension_numbers<[1], [0], [0], [1], [0, 0, 1, 1], [], []>} : vector<64x32xf32>, vector<32x1xf32>, vector<64x1xf32> -> vector<64x1xf32>
    %c0_210 = arith.constant 0 : index
    %c0_211 = arith.constant 0 : index
    %597 = vector.load %arg8[%c0_210, %c0_211] : memref<1x1xf32, #tpu.memory_space<vmem>>, vector<1x1xf32>
    %598 = vector.broadcast %597 : vector<1x1xf32> to vector<64x1xf32>
    %599 = arith.addf %596, %598 : vector<64x1xf32>
    %c0_212 = arith.constant 0 : index
    %c0_213 = arith.constant 0 : index
    %600 = vector.load %arg9[%c0_212, %c0_213] : memref<64x1xf32, #tpu.memory_space<vmem>>, vector<64x1xf32>
    tpu.vector_store %arg9[%c0_212, %c0_213], %599 {strides = array<i32>} : memref<64x1xf32, #tpu.memory_space<vmem>>, vector<64x1xf32>,
    return
  }
}

</mosaic_0001>

<llo_original>
// kernel: tpu_custom_call.1
$region0: #{tpu_custom_call.1}
  #allocation0 [shape = 'u32[]', space=smem, size = 0x4, offset = 0x4, fixed_abs, tag = 'smem constant byte address 0x4 - core index']
  #allocation1 [shape = 'u32[144,128]{1,0:T(1,128)}', space=vmem, size = 0x12000, scoped, tag = 'internal scratch']
  #allocation2 [shape = 'f32[64,32]{1,0:T(8,128)}', space=vmem, size = 0x8000, scoped, tag = 'scratch operand']
  #allocation3 [shape = 'f32[1,1]{1,0:T(1,128)S(1)}', space=vmem, size = 0x200, scoped, tag = 'scoped memory for tpu_custom_call.1']
  %s0 = inlined_call_operand.vmem [shape: f32[64,8], index: 0, kind: input, shape index: {}]
  %s1 = inlined_call_operand.vmem [shape: f32[8,128], index: 1, kind: input, shape index: {}]
  %s2 = inlined_call_operand.vmem [shape: f32[32,128], index: 2, kind: input, shape index: {}]
  %s3 = inlined_call_operand.vmem [shape: f32[1,128], index: 3, kind: input, shape index: {}]
  %s4 = inlined_call_operand.vmem [shape: f32[32,128], index: 4, kind: input, shape index: {}]
  %s5 = inlined_call_operand.vmem [shape: f32[32,128], index: 5, kind: input, shape index: {}]
  %s6 = inlined_call_operand.vmem [shape: f32[1,128], index: 6, kind: input, shape index: {}]
  %s7 = inlined_call_operand.vmem [shape: f32[32,1], index: 7, kind: input, shape index: {}]
  %s8 = inlined_call_operand.<no memory space> [shape: f32[1,1], index: 8, kind: input, shape index: {}]
  %s9 = inlined_call_operand.vmem [shape: f32[64,1], index: 9, kind: output, shape index: {}]
  %s10 = sld [smem:[#allocation0]]
  $region46: #{tpu_custom_call.1} parent=0
    _
  %s12 = ssub.s32 1, %s10
  %s13 = scalar_select 0, %s12, %s10
  %v14 = vstv %s8
  %15 = vst [vmem:[#allocation3] sm:$0x1] %v14
  // Predicated region
  $region2: #{tpu_custom_call.1} parent=0 // pred_check
    _
  $region3: #{tpu_custom_call.1} parent=0 // pred_check_branch
    %17 = sbr.rel (0) target = $region5
  $region4: #{tpu_custom_call.1} parent=0 // pred_region
    _
  $region5: #{tpu_custom_call.1} parent=0 // pred_fallthru
    _
  // Predicated region
  $region6: #{tpu_custom_call.1} parent=0 // pred_check
    _
  $region7: #{tpu_custom_call.1} parent=0 // pred_check_branch
    %19 = sbr.rel (0) target = $region9
  $region8: #{tpu_custom_call.1} parent=0 // pred_region
    _
  $region9: #{tpu_custom_call.1} parent=0 // pred_fallthru
    _
  // Predicated region
  $region10: #{tpu_custom_call.1} parent=0 // pred_check
    _
  $region11: #{tpu_custom_call.1} parent=0 // pred_check_branch
    %21 = sbr.rel (0) target = $region13
  $region12: #{tpu_custom_call.1} parent=0 // pred_region
    _
  $region13: #{tpu_custom_call.1} parent=0 // pred_fallthru
    _
  // Predicated region
  $region14: #{tpu_custom_call.1} parent=0 // pred_check
    _
  $region15: #{tpu_custom_call.1} parent=0 // pred_check_branch
    %23 = sbr.rel (0) target = $region17
  $region16: #{tpu_custom_call.1} parent=0 // pred_region
    _
  $region17: #{tpu_custom_call.1} parent=0 // pred_fallthru
    _
  // Predicated region
  $region18: #{tpu_custom_call.1} parent=0 // pred_check
    _
  $region19: #{tpu_custom_call.1} parent=0 // pred_check_branch
    %25 = sbr.rel (0) target = $region21
  $region20: #{tpu_custom_call.1} parent=0 // pred_region
    _
  $region21: #{tpu_custom_call.1} parent=0 // pred_fallthru
    _
  // Predicated region
  $region22: #{tpu_custom_call.1} parent=0 // pred_check
    _
  $region23: #{tpu_custom_call.1} parent=0 // pred_check_branch
    %27 = sbr.rel (0) target = $region25
  $region24: #{tpu_custom_call.1} parent=0 // pred_region
    _
  $region25: #{tpu_custom_call.1} parent=0 // pred_fallthru
    _
  // Predicated region
  $region26: #{tpu_custom_call.1} parent=0 // pred_check
    _
  $region27: #{tpu_custom_call.1} parent=0 // pred_check_branch
    %29 = sbr.rel (0) target = $region29
  $region28: #{tpu_custom_call.1} parent=0 // pred_region
    _
  $region29: #{tpu_custom_call.1} parent=0 // pred_fallthru
    _
  // Predicated region
  $region30: #{tpu_custom_call.1} parent=0 // pred_check
    _
  $region31: #{tpu_custom_call.1} parent=0 // pred_check_branch
    %31 = sbr.rel (0) target = $region33
  $region32: #{tpu_custom_call.1} parent=0 // pred_region
    _
  $region33: #{tpu_custom_call.1} parent=0 // pred_fallthru
    _
  // Predicated region
  $region34: #{tpu_custom_call.1} parent=0 // pred_check
    _
  $region35: #{tpu_custom_call.1} parent=0 // pred_check_branch
    %33 = sbr.rel (0) target = $region37
  $region36: #{tpu_custom_call.1} parent=0 // pred_region
    _
  $region37: #{tpu_custom_call.1} parent=0 // pred_fallthru
    _
  %v34 = vld [vmem:[%s0] sm:$0xff]
  %v35 = vld [vmem:[%s0 + $0x8] sm:$0xff]
  %v36 = vld [vmem:[%s0 + $0x10] sm:$0xff]
  %v37 = vld [vmem:[%s0 + $0x18] sm:$0xff]
  %v38 = vld [vmem:[%s0 + $0x20] sm:$0xff]
  %v39 = vld [vmem:[%s0 + $0x28] sm:$0xff]
  %v40 = vld [vmem:[%s0 + $0x30] sm:$0xff]
  %v41 = vld [vmem:[%s0 + $0x38] sm:$0xff]
  %v42 = vld [vmem:[%s2] sm:$0xff]
  %v43 = vld [vmem:[%s2 + $0x8] sm:$0xff]
  %v44 = vld [vmem:[%s2 + $0x10] sm:$0xff]
  %v45 = vld [vmem:[%s2 + $0x18] sm:$0xff]
  %v46 = vld [vmem:[%s3] sm:$0x1]
  %v48 = vlaneseq
  %v49 = vshrl.u32 %v48, 7
  %v50 = vsub.s32 0, %v49
  %v51 = vrot.slane %v46, %v50
  %v53 = vld [vmem:[%s1] sm:$0xff]
  %vm54 = vcmask 64512
  %v56 = vsel %vm54, %v34, 0
  %v59 = vsel %vm54, %v35, 0
  %v62 = vsel %vm54, %v36, 0
  %v65 = vsel %vm54, %v37, 0
  %v68 = vsel %vm54, %v38, 0
  %v71 = vsel %vm54, %v39, 0
  %v74 = vsel %vm54, %v40, 0
  %v77 = vsel %vm54, %v41, 0
  %79 = vmatprep.subr.mxu0 0.0
  %80 = vmatpush1.msra.mxu0 %v53
  %81 = vmatprep.subr.mxu0 0.0
  %82 = vmatpush1.msra.mxu0 0.0
  %83 = vmatprep.subr.mxu0 0.0
  %84 = vmatpush1.msra.mxu0 0.0
  %85 = vmatprep.subr.mxu0 0.0
  %86 = vmatpush1.msra.mxu0 0.0
  %87 = vmatprep.subr.mxu0 0.0
  %88 = vmatpush1.msra.mxu0 0.0
  %89 = vmatprep.subr.mxu0 0.0
  %90 = vmatpush1.msra.mxu0 0.0
  %91 = vmatprep.subr.mxu0 0.0
  %92 = vmatpush1.msra.mxu0 0.0
  %93 = vmatprep.subr.mxu0 0.0
  %94 = vmatpush1.msra.mxu0 0.0
  %95 = vmatprep.subr.mxu0 0.0
  %96 = vmatpush1.msra.mxu0 0.0
  %97 = vmatprep.subr.mxu0 0.0
  %98 = vmatpush1.msra.mxu0 0.0
  %99 = vmatprep.subr.mxu0 0.0
  %100 = vmatpush1.msra.mxu0 0.0
  %101 = vmatprep.subr.mxu0 0.0
  %102 = vmatpush1.msra.mxu0 0.0
  %103 = vmatprep.subr.mxu0 0.0
  %104 = vmatpush1.msra.mxu0 0.0
  %105 = vmatprep.subr.mxu0 0.0
  %106 = vmatpush1.msra.mxu0 0.0
  %107 = vmatprep.subr.mxu0 0.0
  %108 = vmatpush1.msra.mxu0 0.0
  %109 = vmatprep.subr.mxu0 0.0
  %110 = vmatpush1.msra.mxu0 0.0
  %111 = vmatprep.subr.mxu0 0.0
  %112 = vmatpush1.msra.mxu0 0.0
  %113 = vmatprep.subr.mxu0 0.0
  %114 = vmatpush1.msra.mxu0 0.0
  %115 = vmatprep.subr.mxu0 0.0
  %116 = vmatpush1.msra.mxu0 0.0
  %117 = vmatprep.subr.mxu0 0.0
  %118 = vmatpush1.msra.mxu0 0.0
  %119 = vmatprep.subr.mxu0 0.0
  %120 = vmatpush1.msra.mxu0 0.0
  %121 = vmatprep.subr.mxu0 0.0
  %122 = vmatpush1.msra.mxu0 0.0
  %123 = vmatprep.subr.mxu0 0.0
  %124 = vmatpush1.msra.mxu0 0.0
  %125 = vmatprep.subr.mxu0 0.0
  %126 = vmatpush1.msra.mxu0 0.0
  %127 = vmatprep.subr.mxu0 0.0
  %128 = vmatpush1.msra.mxu0 0.0
  %129 = vmatprep.subr.mxu0 0.0
  %130 = vmatpush1.msra.mxu0 0.0
  %131 = vmatprep.subr.mxu0 0.0
  %132 = vmatpush1.msra.mxu0 0.0
  %133 = vmatprep.subr.mxu0 0.0
  %134 = vmatpush1.msra.mxu0 0.0
  %135 = vmatprep.subr.mxu0 0.0
  %136 = vmatpush1.msra.mxu0 0.0
  %137 = vmatprep.subr.mxu0 0.0
  %138 = vmatpush1.msra.mxu0 0.0
  %139 = vmatprep.subr.mxu0 0.0
  %140 = vmatpush1.msra.mxu0 0.0
  %141 = vmatprep.subr.mxu0 0.0
  %142 = vmatpush1.msra.mxu0 0.0
  %143 = vmatprep.mubr.f32.mxu0 0.0
  %144 = vmatmul.mubr.f32.gmra.mrb[0].mxu0 %v56
  %v145 = vpop.f32.mrb[0].mxu0
  %v146 = vadd.f32 0.0, %v145
  %v147 = vpop.f32.mrb[0].mxu0
  %148 = vmatprep.mubr.f32.mxu0 0.0
  %149 = vmatmul.mubr.f32.gmra.mrb[0].mxu0 %v59
  %v150 = vpop.f32.mrb[0].mxu0
  %v151 = vadd.f32 0.0, %v150
  %v152 = vpop.f32.mrb[0].mxu0
  %153 = vmatprep.mubr.f32.mxu0 0.0
  %154 = vmatmul.mubr.f32.gmra.mrb[0].mxu0 %v62
  %v155 = vpop.f32.mrb[0].mxu0
  %v156 = vadd.f32 0.0, %v155
  %v157 = vpop.f32.mrb[0].mxu0
  %158 = vmatprep.mubr.f32.mxu0 0.0
  %159 = vmatmul.mubr.f32.gmra.mrb[0].mxu0 %v65
  %v160 = vpop.f32.mrb[0].mxu0
  %v161 = vadd.f32 0.0, %v160
  %v162 = vpop.f32.mrb[0].mxu0
  %163 = vmatprep.mubr.f32.mxu0 0.0
  %164 = vmatmul.mubr.f32.gmra.mrb[0].mxu0 %v68
  %v165 = vpop.f32.mrb[0].mxu0
  %v166 = vadd.f32 0.0, %v165
  %v167 = vpop.f32.mrb[0].mxu0
  %168 = vmatprep.mubr.f32.mxu0 0.0
  %169 = vmatmul.mubr.f32.gmra.mrb[0].mxu0 %v71
  %v170 = vpop.f32.mrb[0].mxu0
  %v171 = vadd.f32 0.0, %v170
  %v172 = vpop.f32.mrb[0].mxu0
  %173 = vmatprep.mubr.f32.mxu0 0.0
  %174 = vmatmul.mubr.f32.gmra.mrb[0].mxu0 %v74
  %v175 = vpop.f32.mrb[0].mxu0
  %v176 = vadd.f32 0.0, %v175
  %v177 = vpop.f32.mrb[0].mxu0
  %178 = vmatprep.mubr.f32.mxu0 0.0
  %179 = vmatmul.mubr.f32.gmra.mrb[0].mxu0 %v77
  %v180 = vpop.f32.mrb[0].mxu0
  %v181 = vadd.f32 0.0, %v180
  %v182 = vpop.f32.mrb[0].mxu0
  %183 = vdwg.mxu0
  %vm184 = vcmask 261120
  %v186 = vsel %vm184, 0.0, 0
  %188 = vmatprep.subr.mxu0 0.0
  %189 = vmatpush1.msra.mxu0 %v42
  %190 = vmatprep.subr.mxu0 0.0
  %191 = vmatpush1.msra.mxu0 %v43
  %192 = vmatprep.subr.mxu0 0.0
  %193 = vmatpush1.msra.mxu0 %v44
  %194 = vmatprep.subr.mxu0 0.0
  %195 = vmatpush1.msra.mxu0 %v45
  %196 = vmatprep.subr.mxu0 0.0
  %197 = vmatpush1.msra.mxu0 0.0
  %198 = vmatprep.subr.mxu0 0.0
  %199 = vmatpush1.msra.mxu0 0.0
  %200 = vmatprep.subr.mxu0 0.0
  %201 = vmatpush1.msra.mxu0 0.0
  %202 = vmatprep.subr.mxu0 0.0
  %203 = vmatpush1.msra.mxu0 0.0
  %204 = vmatprep.subr.mxu0 0.0
  %205 = vmatpush1.msra.mxu0 0.0
  %206 = vmatprep.subr.mxu0 0.0
  %207 = vmatpush1.msra.mxu0 0.0
  %208 = vmatprep.subr.mxu0 0.0
  %209 = vmatpush1.msra.mxu0 0.0
  %210 = vmatprep.subr.mxu0 0.0
  %211 = vmatpush1.msra.mxu0 0.0
  %212 = vmatprep.subr.mxu0 0.0
  %213 = vmatpush1.msra.mxu0 0.0
  %214 = vmatprep.subr.mxu0 0.0
  %215 = vmatpush1.msra.mxu0 0.0
  %216 = vmatprep.subr.mxu0 0.0
  %217 = vmatpush1.msra.mxu0 0.0
  %218 = vmatprep.subr.mxu0 0.0
  %219 = vmatpush1.msra.mxu0 0.0
  %220 = vmatprep.subr.mxu0 0.0
  %221 = vmatpush1.msra.mxu0 0.0
  %222 = vmatprep.subr.mxu0 0.0
  %223 = vmatpush1.msra.mxu0 0.0
  %224 = vmatprep.subr.mxu0 0.0
  %225 = vmatpush1.msra.mxu0 0.0
  %226 = vmatprep.subr.mxu0 0.0
  %227 = vmatpush1.msra.mxu0 0.0
  %228 = vmatprep.subr.mxu0 0.0
  %229 = vmatpush1.msra.mxu0 0.0
  %230 = vmatprep.subr.mxu0 0.0
  %231 = vmatpush1.msra.mxu0 0.0
  %232 = vmatprep.subr.mxu0 0.0
  %233 = vmatpush1.msra.mxu0 0.0
  %234 = vmatprep.subr.mxu0 0.0
  %235 = vmatpush1.msra.mxu0 0.0
  %236 = vmatprep.subr.mxu0 0.0
  %237 = vmatpush1.msra.mxu0 0.0
  %238 = vmatprep.subr.mxu0 0.0
  %239 = vmatpush1.msra.mxu0 0.0
  %240 = vmatprep.subr.mxu0 0.0
  %241 = vmatpush1.msra.mxu0 0.0
  %242 = vmatprep.subr.mxu0 0.0
  %243 = vmatpush1.msra.mxu0 0.0
  %244 = vmatprep.subr.mxu0 0.0
  %245 = vmatpush1.msra.mxu0 0.0
  %246 = vmatprep.subr.mxu0 0.0
  %247 = vmatpush1.msra.mxu0 0.0
  %248 = vmatprep.subr.mxu0 0.0
  %249 = vmatpush1.msra.mxu0 0.0
  %250 = vmatprep.subr.mxu0 0.0
  %251 = vmatpush1.msra.mxu0 0.0
  %252 = vmatprep.mubr.f32.mxu0 0.0
  %253 = vmatmul.mubr.f32.gmra.mrb[0].mxu0 %v186
  %v254 = vpop.f32.mrb[0].mxu0
  %v255 = vadd.f32 0.0, %v254
  %v256 = vpop.f32.mrb[0].mxu0
  %257 = vdwg.mxu0
  %v258 = vadd.f32 %v146, %v255
  %v259 = vadd.f32 %v258, %v51
  %v260 = vmul.f32 %v259, 0.5
  %v261 = vtanh.pop %v260
  %v262 = vmul.f32 %v261, 0.5
  %v263 = vadd.f32 %v262, 0.5
  %v264 = vtanh.pop %v259
  %v265 = vmul.f32 %v263, 0.0
  %267 = vrot.lane.b32.xlu0 %v264, 64
  %v268 = vpop.permute.xlu0 %267
  %v270 = vmul.f32 %v263, %v268
  %272 = vrot.lane.b32.xlu0 %v270, 32
  %v273 = vpop.permute.xlu0 %272
  %v275 = vadd.f32 %v265, %v273
  %v276 = vtanh.pop %v275
  %278 = vrot.lane.b32.xlu0 %v276, 64
  %v279 = vpop.permute.xlu0 %278
  %v281 = vmul.f32 %v263, %v279
  %283 = vrot.lane.b32.xlu0 %v281, 32
  %v284 = vpop.permute.xlu0 %283
  %286 = vst.msk [vmem:[#allocation2] sm:$0xff] %vm184, %v284
  %v287 = vsel %vm184, %v284, 0
  %289 = vmatprep.subr.mxu0 0.0
  %290 = vmatpush1.msra.mxu0 %v42
  %291 = vmatprep.subr.mxu0 0.0
  %292 = vmatpush1.msra.mxu0 %v43
  %293 = vmatprep.subr.mxu0 0.0
  %294 = vmatpush1.msra.mxu0 %v44
  %295 = vmatprep.subr.mxu0 0.0
  %296 = vmatpush1.msra.mxu0 %v45
  %297 = vmatprep.subr.mxu0 0.0
  %298 = vmatpush1.msra.mxu0 0.0
  %299 = vmatprep.subr.mxu0 0.0
  %300 = vmatpush1.msra.mxu0 0.0
  %301 = vmatprep.subr.mxu0 0.0
  %302 = vmatpush1.msra.mxu0 0.0
  %303 = vmatprep.subr.mxu0 0.0
  %304 = vmatpush1.msra.mxu0 0.0
  %305 = vmatprep.subr.mxu0 0.0
  %306 = vmatpush1.msra.mxu0 0.0
  %307 = vmatprep.subr.mxu0 0.0
  %308 = vmatpush1.msra.mxu0 0.0
  %309 = vmatprep.subr.mxu0 0.0
  %310 = vmatpush1.msra.mxu0 0.0
  %311 = vmatprep.subr.mxu0 0.0
  %312 = vmatpush1.msra.mxu0 0.0
  %313 = vmatprep.subr.mxu0 0.0
  %314 = vmatpush1.msra.mxu0 0.0
  %315 = vmatprep.subr.mxu0 0.0
  %316 = vmatpush1.msra.mxu0 0.0
  %317 = vmatprep.subr.mxu0 0.0
  %318 = vmatpush1.msra.mxu0 0.0
  %319 = vmatprep.subr.mxu0 0.0
  %320 = vmatpush1.msra.mxu0 0.0
  %321 = vmatprep.subr.mxu0 0.0
  %322 = vmatpush1.msra.mxu0 0.0
  %323 = vmatprep.subr.mxu0 0.0
  %324 = vmatpush1.msra.mxu0 0.0
  %325 = vmatprep.subr.mxu0 0.0
  %326 = vmatpush1.msra.mxu0 0.0
  %327 = vmatprep.subr.mxu0 0.0
  %328 = vmatpush1.msra.mxu0 0.0
  %329 = vmatprep.subr.mxu0 0.0
  %330 = vmatpush1.msra.mxu0 0.0
  %331 = vmatprep.subr.mxu0 0.0
  %332 = vmatpush1.msra.mxu0 0.0
  %333 = vmatprep.subr.mxu0 0.0
  %334 = vmatpush1.msra.mxu0 0.0
  %335 = vmatprep.subr.mxu0 0.0
  %336 = vmatpush1.msra.mxu0 0.0
  %337 = vmatprep.subr.mxu0 0.0
  %338 = vmatpush1.msra.mxu0 0.0
  %339 = vmatprep.subr.mxu0 0.0
  %340 = vmatpush1.msra.mxu0 0.0
  %341 = vmatprep.subr.mxu0 0.0
  %342 = vmatpush1.msra.mxu0 0.0
  %343 = vmatprep.subr.mxu0 0.0
  %344 = vmatpush1.msra.mxu0 0.0
  %345 = vmatprep.subr.mxu0 0.0
  %346 = vmatpush1.msra.mxu0 0.0
  %347 = vmatprep.subr.mxu0 0.0
  %348 = vmatpush1.msra.mxu0 0.0
  %349 = vmatprep.subr.mxu0 0.0
  %350 = vmatpush1.msra.mxu0 0.0
  %351 = vmatprep.subr.mxu0 0.0
  %352 = vmatpush1.msra.mxu0 0.0
  %353 = vmatprep.mubr.f32.mxu0 0.0
  %354 = vmatmul.mubr.f32.gmra.mrb[0].mxu0 %v287
  %v355 = vpop.f32.mrb[0].mxu0
  %v356 = vadd.f32 0.0, %v355
  %v357 = vpop.f32.mrb[0].mxu0
  %358 = vdwg.mxu0
  %v359 = vadd.f32 %v151, %v356
  %v360 = vadd.f32 %v359, %v51
  %v361 = vmul.f32 %v360, 0.5
  %v362 = vtanh.pop %v361
  %v363 = vmul.f32 %v362, 0.5
  %v364 = vadd.f32 %v363, 0.5
  %v365 = vtanh.pop %v360
  %v366 = vmul.f32 %v364, %v275
  %368 = vrot.lane.b32.xlu0 %v365, 64
  %v369 = vpop.permute.xlu0 %368
  %v371 = vmul.f32 %v364, %v369
  %373 = vrot.lane.b32.xlu0 %v371, 32
  %v374 = vpop.permute.xlu0 %373
  %v376 = vadd.f32 %v366, %v374
  %v377 = vtanh.pop %v376
  %379 = vrot.lane.b32.xlu0 %v377, 64
  %v380 = vpop.permute.xlu0 %379
  %v382 = vmul.f32 %v364, %v380
  %384 = vrot.lane.b32.xlu0 %v382, 32
  %v385 = vpop.permute.xlu0 %384
  %387 = vst.msk [vmem:[#allocation2 + $0x8] sm:$0xff] %vm184, %v385
  %v388 = vsel %vm184, %v385, 0
  %390 = vmatprep.subr.mxu0 0.0
  %391 = vmatpush1.msra.mxu0 %v42
  %392 = vmatprep.subr.mxu0 0.0
  %393 = vmatpush1.msra.mxu0 %v43
  %394 = vmatprep.subr.mxu0 0.0
  %395 = vmatpush1.msra.mxu0 %v44
  %396 = vmatprep.subr.mxu0 0.0
  %397 = vmatpush1.msra.mxu0 %v45
  %398 = vmatprep.subr.mxu0 0.0
  %399 = vmatpush1.msra.mxu0 0.0
  %400 = vmatprep.subr.mxu0 0.0
  %401 = vmatpush1.msra.mxu0 0.0
  %402 = vmatprep.subr.mxu0 0.0
  %403 = vmatpush1.msra.mxu0 0.0
  %404 = vmatprep.subr.mxu0 0.0
  %405 = vmatpush1.msra.mxu0 0.0
  %406 = vmatprep.subr.mxu0 0.0
  %407 = vmatpush1.msra.mxu0 0.0
  %408 = vmatprep.subr.mxu0 0.0
  %409 = vmatpush1.msra.mxu0 0.0
  %410 = vmatprep.subr.mxu0 0.0
  %411 = vmatpush1.msra.mxu0 0.0
  %412 = vmatprep.subr.mxu0 0.0
  %413 = vmatpush1.msra.mxu0 0.0
  %414 = vmatprep.subr.mxu0 0.0
  %415 = vmatpush1.msra.mxu0 0.0
  %416 = vmatprep.subr.mxu0 0.0
  %417 = vmatpush1.msra.mxu0 0.0
  %418 = vmatprep.subr.mxu0 0.0
  %419 = vmatpush1.msra.mxu0 0.0
  %420 = vmatprep.subr.mxu0 0.0
  %421 = vmatpush1.msra.mxu0 0.0
  %422 = vmatprep.subr.mxu0 0.0
  %423 = vmatpush1.msra.mxu0 0.0
  %424 = vmatprep.subr.mxu0 0.0
  %425 = vmatpush1.msra.mxu0 0.0
  %426 = vmatprep.subr.mxu0 0.0
  %427 = vmatpush1.msra.mxu0 0.0
  %428 = vmatprep.subr.mxu0 0.0
  %429 = vmatpush1.msra.mxu0 0.0
  %430 = vmatprep.subr.mxu0 0.0
  %431 = vmatpush1.msra.mxu0 0.0
  %432 = vmatprep.subr.mxu0 0.0
  %433 = vmatpush1.msra.mxu0 0.0
  %434 = vmatprep.subr.mxu0 0.0
  %435 = vmatpush1.msra.mxu0 0.0
  %436 = vmatprep.subr.mxu0 0.0
  %437 = vmatpush1.msra.mxu0 0.0
  %438 = vmatprep.subr.mxu0 0.0
  %439 = vmatpush1.msra.mxu0 0.0
  %440 = vmatprep.subr.mxu0 0.0
  %441 = vmatpush1.msra.mxu0 0.0
  %442 = vmatprep.subr.mxu0 0.0
  %443 = vmatpush1.msra.mxu0 0.0
  %444 = vmatprep.subr.mxu0 0.0
  %445 = vmatpush1.msra.mxu0 0.0
  %446 = vmatprep.subr.mxu0 0.0
  %447 = vmatpush1.msra.mxu0 0.0
  %448 = vmatprep.subr.mxu0 0.0
  %449 = vmatpush1.msra.mxu0 0.0
  %450 = vmatprep.subr.mxu0 0.0
  %451 = vmatpush1.msra.mxu0 0.0
  %452 = vmatprep.subr.mxu0 0.0
  %453 = vmatpush1.msra.mxu0 0.0
  %454 = vmatprep.mubr.f32.mxu0 0.0
  %455 = vmatmul.mubr.f32.gmra.mrb[0].mxu0 %v388
  %v456 = vpop.f32.mrb[0].mxu0
  %v457 = vadd.f32 0.0, %v456
  %v458 = vpop.f32.mrb[0].mxu0
  %459 = vdwg.mxu0
  %v460 = vadd.f32 %v156, %v457
  %v461 = vadd.f32 %v460, %v51
  %v462 = vmul.f32 %v461, 0.5
  %v463 = vtanh.pop %v462
  %v464 = vmul.f32 %v463, 0.5
  %v465 = vadd.f32 %v464, 0.5
  %v466 = vtanh.pop %v461
  %v467 = vmul.f32 %v465, %v376
  %469 = vrot.lane.b32.xlu0 %v466, 64
  %v470 = vpop.permute.xlu0 %469
  %v472 = vmul.f32 %v465, %v470
  %474 = vrot.lane.b32.xlu0 %v472, 32
  %v475 = vpop.permute.xlu0 %474
  %v477 = vadd.f32 %v467, %v475
  %v478 = vtanh.pop %v477
  %480 = vrot.lane.b32.xlu0 %v478, 64
  %v481 = vpop.permute.xlu0 %480
  %v483 = vmul.f32 %v465, %v481
  %485 = vrot.lane.b32.xlu0 %v483, 32
  %v486 = vpop.permute.xlu0 %485
  %488 = vst.msk [vmem:[#allocation2 + $0x10] sm:$0xff] %vm184, %v486
  %v489 = vsel %vm184, %v486, 0
  %491 = vmatprep.subr.mxu0 0.0
  %492 = vmatpush1.msra.mxu0 %v42
  %493 = vmatprep.subr.mxu0 0.0
  %494 = vmatpush1.msra.mxu0 %v43
  %495 = vmatprep.subr.mxu0 0.0
  %496 = vmatpush1.msra.mxu0 %v44
  %497 = vmatprep.subr.mxu0 0.0
  %498 = vmatpush1.msra.mxu0 %v45
  %499 = vmatprep.subr.mxu0 0.0
  %500 = vmatpush1.msra.mxu0 0.0
  %501 = vmatprep.subr.mxu0 0.0
  %502 = vmatpush1.msra.mxu0 0.0
  %503 = vmatprep.subr.mxu0 0.0
  %504 = vmatpush1.msra.mxu0 0.0
  %505 = vmatprep.subr.mxu0 0.0
  %506 = vmatpush1.msra.mxu0 0.0
  %507 = vmatprep.subr.mxu0 0.0
  %508 = vmatpush1.msra.mxu0 0.0
  %509 = vmatprep.subr.mxu0 0.0
  %510 = vmatpush1.msra.mxu0 0.0
  %511 = vmatprep.subr.mxu0 0.0
  %512 = vmatpush1.msra.mxu0 0.0
  %513 = vmatprep.subr.mxu0 0.0
  %514 = vmatpush1.msra.mxu0 0.0
  %515 = vmatprep.subr.mxu0 0.0
  %516 = vmatpush1.msra.mxu0 0.0
  %517 = vmatprep.subr.mxu0 0.0
  %518 = vmatpush1.msra.mxu0 0.0
  %519 = vmatprep.subr.mxu0 0.0
  %520 = vmatpush1.msra.mxu0 0.0
  %521 = vmatprep.subr.mxu0 0.0
  %522 = vmatpush1.msra.mxu0 0.0
  %523 = vmatprep.subr.mxu0 0.0
  %524 = vmatpush1.msra.mxu0 0.0
  %525 = vmatprep.subr.mxu0 0.0
  %526 = vmatpush1.msra.mxu0 0.0
  %527 = vmatprep.subr.mxu0 0.0
  %528 = vmatpush1.msra.mxu0 0.0
  %529 = vmatprep.subr.mxu0 0.0
  %530 = vmatpush1.msra.mxu0 0.0
  %531 = vmatprep.subr.mxu0 0.0
  %532 = vmatpush1.msra.mxu0 0.0
  %533 = vmatprep.subr.mxu0 0.0
  %534 = vmatpush1.msra.mxu0 0.0
  %535 = vmatprep.subr.mxu0 0.0
  %536 = vmatpush1.msra.mxu0 0.0
  %537 = vmatprep.subr.mxu0 0.0
  %538 = vmatpush1.msra.mxu0 0.0
  %539 = vmatprep.subr.mxu0 0.0
  %540 = vmatpush1.msra.mxu0 0.0
  %541 = vmatprep.subr.mxu0 0.0
  %542 = vmatpush1.msra.mxu0 0.0
  %543 = vmatprep.subr.mxu0 0.0
  %544 = vmatpush1.msra.mxu0 0.0
  %545 = vmatprep.subr.mxu0 0.0
  %546 = vmatpush1.msra.mxu0 0.0
  %547 = vmatprep.subr.mxu0 0.0
  %548 = vmatpush1.msra.mxu0 0.0
  %549 = vmatprep.subr.mxu0 0.0
  %550 = vmatpush1.msra.mxu0 0.0
  %551 = vmatprep.subr.mxu0 0.0
  %552 = vmatpush1.msra.mxu0 0.0
  %553 = vmatprep.subr.mxu0 0.0
  %554 = vmatpush1.msra.mxu0 0.0
  %555 = vmatprep.mubr.f32.mxu0 0.0
  %556 = vmatmul.mubr.f32.gmra.mrb[0].mxu0 %v489
  %v557 = vpop.f32.mrb[0].mxu0
  %v558 = vadd.f32 0.0, %v557
  %v559 = vpop.f32.mrb[0].mxu0
  %560 = vdwg.mxu0
  %v561 = vadd.f32 %v161, %v558
  %v562 = vadd.f32 %v561, %v51
  %v563 = vmul.f32 %v562, 0.5
  %v564 = vtanh.pop %v563
  %v565 = vmul.f32 %v564, 0.5
  %v566 = vadd.f32 %v565, 0.5
  %v567 = vtanh.pop %v562
  %v568 = vmul.f32 %v566, %v477
  %570 = vrot.lane.b32.xlu0 %v567, 64
  %v571 = vpop.permute.xlu0 %570
  %v573 = vmul.f32 %v566, %v571
  %575 = vrot.lane.b32.xlu0 %v573, 32
  %v576 = vpop.permute.xlu0 %575
  %v578 = vadd.f32 %v568, %v576
  %v579 = vtanh.pop %v578
  %581 = vrot.lane.b32.xlu0 %v579, 64
  %v582 = vpop.permute.xlu0 %581
  %v584 = vmul.f32 %v566, %v582
  %586 = vrot.lane.b32.xlu0 %v584, 32
  %v587 = vpop.permute.xlu0 %586
  %589 = vst.msk [vmem:[#allocation2 + $0x18] sm:$0xff] %vm184, %v587
  %v590 = vsel %vm184, %v587, 0
  %592 = vmatprep.subr.mxu0 0.0
  %593 = vmatpush1.msra.mxu0 %v42
  %594 = vmatprep.subr.mxu0 0.0
  %595 = vmatpush1.msra.mxu0 %v43
  %596 = vmatprep.subr.mxu0 0.0
  %597 = vmatpush1.msra.mxu0 %v44
  %598 = vmatprep.subr.mxu0 0.0
  %599 = vmatpush1.msra.mxu0 %v45
  %600 = vmatprep.subr.mxu0 0.0
  %601 = vmatpush1.msra.mxu0 0.0
  %602 = vmatprep.subr.mxu0 0.0
  %603 = vmatpush1.msra.mxu0 0.0
  %604 = vmatprep.subr.mxu0 0.0
  %605 = vmatpush1.msra.mxu0 0.0
  %606 = vmatprep.subr.mxu0 0.0
  %607 = vmatpush1.msra.mxu0 0.0
  %608 = vmatprep.subr.mxu0 0.0
  %609 = vmatpush1.msra.mxu0 0.0
  %610 = vmatprep.subr.mxu0 0.0
  %611 = vmatpush1.msra.mxu0 0.0
  %612 = vmatprep.subr.mxu0 0.0
  %613 = vmatpush1.msra.mxu0 0.0
  %614 = vmatprep.subr.mxu0 0.0
  %615 = vmatpush1.msra.mxu0 0.0
  %616 = vmatprep.subr.mxu0 0.0
  %617 = vmatpush1.msra.mxu0 0.0
  %618 = vmatprep.subr.mxu0 0.0
  %619 = vmatpush1.msra.mxu0 0.0
  %620 = vmatprep.subr.mxu0 0.0
  %621 = vmatpush1.msra.mxu0 0.0
  %622 = vmatprep.subr.mxu0 0.0
  %623 = vmatpush1.msra.mxu0 0.0
  %624 = vmatprep.subr.mxu0 0.0
  %625 = vmatpush1.msra.mxu0 0.0
  %626 = vmatprep.subr.mxu0 0.0
  %627 = vmatpush1.msra.mxu0 0.0
  %628 = vmatprep.subr.mxu0 0.0
  %629 = vmatpush1.msra.mxu0 0.0
  %630 = vmatprep.subr.mxu0 0.0
  %631 = vmatpush1.msra.mxu0 0.0
  %632 = vmatprep.subr.mxu0 0.0
  %633 = vmatpush1.msra.mxu0 0.0
  %634 = vmatprep.subr.mxu0 0.0
  %635 = vmatpush1.msra.mxu0 0.0
  %636 = vmatprep.subr.mxu0 0.0
  %637 = vmatpush1.msra.mxu0 0.0
  %638 = vmatprep.subr.mxu0 0.0
  %639 = vmatpush1.msra.mxu0 0.0
  %640 = vmatprep.subr.mxu0 0.0
  %641 = vmatpush1.msra.mxu0 0.0
  %642 = vmatprep.subr.mxu0 0.0
  %643 = vmatpush1.msra.mxu0 0.0
  %644 = vmatprep.subr.mxu0 0.0
  %645 = vmatpush1.msra.mxu0 0.0
  %646 = vmatprep.subr.mxu0 0.0
  %647 = vmatpush1.msra.mxu0 0.0
  %648 = vmatprep.subr.mxu0 0.0
  %649 = vmatpush1.msra.mxu0 0.0
  %650 = vmatprep.subr.mxu0 0.0
  %651 = vmatpush1.msra.mxu0 0.0
  %652 = vmatprep.subr.mxu0 0.0
  %653 = vmatpush1.msra.mxu0 0.0
  %654 = vmatprep.subr.mxu0 0.0
  %655 = vmatpush1.msra.mxu0 0.0
  %656 = vmatprep.mubr.f32.mxu0 0.0
  %657 = vmatmul.mubr.f32.gmra.mrb[0].mxu0 %v590
  %v658 = vpop.f32.mrb[0].mxu0
  %v659 = vadd.f32 0.0, %v658
  %v660 = vpop.f32.mrb[0].mxu0
  %661 = vdwg.mxu0
  %v662 = vadd.f32 %v166, %v659
  %v663 = vadd.f32 %v662, %v51
  %v664 = vmul.f32 %v663, 0.5
  %v665 = vtanh.pop %v664
  %v666 = vmul.f32 %v665, 0.5
  %v667 = vadd.f32 %v666, 0.5
  %v668 = vtanh.pop %v663
  %v669 = vmul.f32 %v667, %v578
  %671 = vrot.lane.b32.xlu0 %v668, 64
  %v672 = vpop.permute.xlu0 %671
  %v674 = vmul.f32 %v667, %v672
  %676 = vrot.lane.b32.xlu0 %v674, 32
  %v677 = vpop.permute.xlu0 %676
  %v679 = vadd.f32 %v669, %v677
  %v680 = vtanh.pop %v679
  %682 = vrot.lane.b32.xlu0 %v680, 64
  %v683 = vpop.permute.xlu0 %682
  %v685 = vmul.f32 %v667, %v683
  %687 = vrot.lane.b32.xlu0 %v685, 32
  %v688 = vpop.permute.xlu0 %687
  %690 = vst.msk [vmem:[#allocation2 + $0x20] sm:$0xff] %vm184, %v688
  %v691 = vsel %vm184, %v688, 0
  %693 = vmatprep.subr.mxu0 0.0
  %694 = vmatpush1.msra.mxu0 %v42
  %695 = vmatprep.subr.mxu0 0.0
  %696 = vmatpush1.msra.mxu0 %v43
  %697 = vmatprep.subr.mxu0 0.0
  %698 = vmatpush1.msra.mxu0 %v44
  %699 = vmatprep.subr.mxu0 0.0
  %700 = vmatpush1.msra.mxu0 %v45
  %701 = vmatprep.subr.mxu0 0.0
  %702 = vmatpush1.msra.mxu0 0.0
  %703 = vmatprep.subr.mxu0 0.0
  %704 = vmatpush1.msra.mxu0 0.0
  %705 = vmatprep.subr.mxu0 0.0
  %706 = vmatpush1.msra.mxu0 0.0
  %707 = vmatprep.subr.mxu0 0.0
  %708 = vmatpush1.msra.mxu0 0.0
  %709 = vmatprep.subr.mxu0 0.0
  %710 = vmatpush1.msra.mxu0 0.0
  %711 = vmatprep.subr.mxu0 0.0
  %712 = vmatpush1.msra.mxu0 0.0
  %713 = vmatprep.subr.mxu0 0.0
  %714 = vmatpush1.msra.mxu0 0.0
  %715 = vmatprep.subr.mxu0 0.0
  %716 = vmatpush1.msra.mxu0 0.0
  %717 = vmatprep.subr.mxu0 0.0
  %718 = vmatpush1.msra.mxu0 0.0
  %719 = vmatprep.subr.mxu0 0.0
  %720 = vmatpush1.msra.mxu0 0.0
  %721 = vmatprep.subr.mxu0 0.0
  %722 = vmatpush1.msra.mxu0 0.0
  %723 = vmatprep.subr.mxu0 0.0
  %724 = vmatpush1.msra.mxu0 0.0
  %725 = vmatprep.subr.mxu0 0.0
  %726 = vmatpush1.msra.mxu0 0.0
  %727 = vmatprep.subr.mxu0 0.0
  %728 = vmatpush1.msra.mxu0 0.0
  %729 = vmatprep.subr.mxu0 0.0
  %730 = vmatpush1.msra.mxu0 0.0
  %731 = vmatprep.subr.mxu0 0.0
  %732 = vmatpush1.msra.mxu0 0.0
  %733 = vmatprep.subr.mxu0 0.0
  %734 = vmatpush1.msra.mxu0 0.0
  %735 = vmatprep.subr.mxu0 0.0
  %736 = vmatpush1.msra.mxu0 0.0
  %737 = vmatprep.subr.mxu0 0.0
  %738 = vmatpush1.msra.mxu0 0.0
  %739 = vmatprep.subr.mxu0 0.0
  %740 = vmatpush1.msra.mxu0 0.0
  %741 = vmatprep.subr.mxu0 0.0
  %742 = vmatpush1.msra.mxu0 0.0
  %743 = vmatprep.subr.mxu0 0.0
  %744 = vmatpush1.msra.mxu0 0.0
  %745 = vmatprep.subr.mxu0 0.0
  %746 = vmatpush1.msra.mxu0 0.0
  %747 = vmatprep.subr.mxu0 0.0
  %748 = vmatpush1.msra.mxu0 0.0
  %749 = vmatprep.subr.mxu0 0.0
  %750 = vmatpush1.msra.mxu0 0.0
  %751 = vmatprep.subr.mxu0 0.0
  %752 = vmatpush1.msra.mxu0 0.0
  %753 = vmatprep.subr.mxu0 0.0
  %754 = vmatpush1.msra.mxu0 0.0
  %755 = vmatprep.subr.mxu0 0.0
  %756 = vmatpush1.msra.mxu0 0.0
  %757 = vmatprep.mubr.f32.mxu0 0.0
  %758 = vmatmul.mubr.f32.gmra.mrb[0].mxu0 %v691
  %v759 = vpop.f32.mrb[0].mxu0
  %v760 = vadd.f32 0.0, %v759
  %v761 = vpop.f32.mrb[0].mxu0
  %762 = vdwg.mxu0
  %v763 = vadd.f32 %v171, %v760
  %v764 = vadd.f32 %v763, %v51
  %v765 = vmul.f32 %v764, 0.5
  %v766 = vtanh.pop %v765
  %v767 = vmul.f32 %v766, 0.5
  %v768 = vadd.f32 %v767, 0.5
  %v769 = vtanh.pop %v764
  %v770 = vmul.f32 %v768, %v679
  %772 = vrot.lane.b32.xlu0 %v769, 64
  %v773 = vpop.permute.xlu0 %772
  %v775 = vmul.f32 %v768, %v773
  %777 = vrot.lane.b32.xlu0 %v775, 32
  %v778 = vpop.permute.xlu0 %777
  %v780 = vadd.f32 %v770, %v778
  %v781 = vtanh.pop %v780
  %783 = vrot.lane.b32.xlu0 %v781, 64
  %v784 = vpop.permute.xlu0 %783
  %v786 = vmul.f32 %v768, %v784
  %788 = vrot.lane.b32.xlu0 %v786, 32
  %v789 = vpop.permute.xlu0 %788
  %791 = vst.msk [vmem:[#allocation2 + $0x28] sm:$0xff] %vm184, %v789
  %v792 = vsel %vm184, %v789, 0
  %794 = vmatprep.subr.mxu0 0.0
  %795 = vmatpush1.msra.mxu0 %v42
  %796 = vmatprep.subr.mxu0 0.0
  %797 = vmatpush1.msra.mxu0 %v43
  %798 = vmatprep.subr.mxu0 0.0
  %799 = vmatpush1.msra.mxu0 %v44
  %800 = vmatprep.subr.mxu0 0.0
  %801 = vmatpush1.msra.mxu0 %v45
  %802 = vmatprep.subr.mxu0 0.0
  %803 = vmatpush1.msra.mxu0 0.0
  %804 = vmatprep.subr.mxu0 0.0
  %805 = vmatpush1.msra.mxu0 0.0
  %806 = vmatprep.subr.mxu0 0.0
  %807 = vmatpush1.msra.mxu0 0.0
  %808 = vmatprep.subr.mxu0 0.0
  %809 = vmatpush1.msra.mxu0 0.0
  %810 = vmatprep.subr.mxu0 0.0
  %811 = vmatpush1.msra.mxu0 0.0
  %812 = vmatprep.subr.mxu0 0.0
  %813 = vmatpush1.msra.mxu0 0.0
  %814 = vmatprep.subr.mxu0 0.0
  %815 = vmatpush1.msra.mxu0 0.0
  %816 = vmatprep.subr.mxu0 0.0
  %817 = vmatpush1.msra.mxu0 0.0
  %818 = vmatprep.subr.mxu0 0.0
  %819 = vmatpush1.msra.mxu0 0.0
  %820 = vmatprep.subr.mxu0 0.0
  %821 = vmatpush1.msra.mxu0 0.0
  %822 = vmatprep.subr.mxu0 0.0
  %823 = vmatpush1.msra.mxu0 0.0
  %824 = vmatprep.subr.mxu0 0.0
  %825 = vmatpush1.msra.mxu0 0.0
  %826 = vmatprep.subr.mxu0 0.0
  %827 = vmatpush1.msra.mxu0 0.0
  %828 = vmatprep.subr.mxu0 0.0
  %829 = vmatpush1.msra.mxu0 0.0
  %830 = vmatprep.subr.mxu0 0.0
  %831 = vmatpush1.msra.mxu0 0.0
  %832 = vmatprep.subr.mxu0 0.0
  %833 = vmatpush1.msra.mxu0 0.0
  %834 = vmatprep.subr.mxu0 0.0
  %835 = vmatpush1.msra.mxu0 0.0
  %836 = vmatprep.subr.mxu0 0.0
  %837 = vmatpush1.msra.mxu0 0.0
  %838 = vmatprep.subr.mxu0 0.0
  %839 = vmatpush1.msra.mxu0 0.0
  %840 = vmatprep.subr.mxu0 0.0
  %841 = vmatpush1.msra.mxu0 0.0
  %842 = vmatprep.subr.mxu0 0.0
  %843 = vmatpush1.msra.mxu0 0.0
  %844 = vmatprep.subr.mxu0 0.0
  %845 = vmatpush1.msra.mxu0 0.0
  %846 = vmatprep.subr.mxu0 0.0
  %847 = vmatpush1.msra.mxu0 0.0
  %848 = vmatprep.subr.mxu0 0.0
  %849 = vmatpush1.msra.mxu0 0.0
  %850 = vmatprep.subr.mxu0 0.0
  %851 = vmatpush1.msra.mxu0 0.0
  %852 = vmatprep.subr.mxu0 0.0
  %853 = vmatpush1.msra.mxu0 0.0
  %854 = vmatprep.subr.mxu0 0.0
  %855 = vmatpush1.msra.mxu0 0.0
  %856 = vmatprep.subr.mxu0 0.0
  %857 = vmatpush1.msra.mxu0 0.0
  %858 = vmatprep.mubr.f32.mxu0 0.0
  %859 = vmatmul.mubr.f32.gmra.mrb[0].mxu0 %v792
  %v860 = vpop.f32.mrb[0].mxu0
  %v861 = vadd.f32 0.0, %v860
  %v862 = vpop.f32.mrb[0].mxu0
  %863 = vdwg.mxu0
  %v864 = vadd.f32 %v176, %v861
  %v865 = vadd.f32 %v864, %v51
  %v866 = vmul.f32 %v865, 0.5
  %v867 = vtanh.pop %v866
  %v868 = vmul.f32 %v867, 0.5
  %v869 = vadd.f32 %v868, 0.5
  %v870 = vtanh.pop %v865
  %v871 = vmul.f32 %v869, %v780
  %873 = vrot.lane.b32.xlu0 %v870, 64
  %v874 = vpop.permute.xlu0 %873
  %v876 = vmul.f32 %v869, %v874
  %878 = vrot.lane.b32.xlu0 %v876, 32
  %v879 = vpop.permute.xlu0 %878
  %v881 = vadd.f32 %v871, %v879
  %v882 = vtanh.pop %v881
  %884 = vrot.lane.b32.xlu0 %v882, 64
  %v885 = vpop.permute.xlu0 %884
  %v887 = vmul.f32 %v869, %v885
  %889 = vrot.lane.b32.xlu0 %v887, 32
  %v890 = vpop.permute.xlu0 %889
  %892 = vst.msk [vmem:[#allocation2 + $0x30] sm:$0xff] %vm184, %v890
  %v893 = vsel %vm184, %v890, 0
  %895 = vmatprep.subr.mxu0 0.0
  %896 = vmatpush1.msra.mxu0 %v42
  %897 = vmatprep.subr.mxu0 0.0
  %898 = vmatpush1.msra.mxu0 %v43
  %899 = vmatprep.subr.mxu0 0.0
  %900 = vmatpush1.msra.mxu0 %v44
  %901 = vmatprep.subr.mxu0 0.0
  %902 = vmatpush1.msra.mxu0 %v45
  %903 = vmatprep.subr.mxu0 0.0
  %904 = vmatpush1.msra.mxu0 0.0
  %905 = vmatprep.subr.mxu0 0.0
  %906 = vmatpush1.msra.mxu0 0.0
  %907 = vmatprep.subr.mxu0 0.0
  %908 = vmatpush1.msra.mxu0 0.0
  %909 = vmatprep.subr.mxu0 0.0
  %910 = vmatpush1.msra.mxu0 0.0
  %911 = vmatprep.subr.mxu0 0.0
  %912 = vmatpush1.msra.mxu0 0.0
  %913 = vmatprep.subr.mxu0 0.0
  %914 = vmatpush1.msra.mxu0 0.0
  %915 = vmatprep.subr.mxu0 0.0
  %916 = vmatpush1.msra.mxu0 0.0
  %917 = vmatprep.subr.mxu0 0.0
  %918 = vmatpush1.msra.mxu0 0.0
  %919 = vmatprep.subr.mxu0 0.0
  %920 = vmatpush1.msra.mxu0 0.0
  %921 = vmatprep.subr.mxu0 0.0
  %922 = vmatpush1.msra.mxu0 0.0
  %923 = vmatprep.subr.mxu0 0.0
  %924 = vmatpush1.msra.mxu0 0.0
  %925 = vmatprep.subr.mxu0 0.0
  %926 = vmatpush1.msra.mxu0 0.0
  %927 = vmatprep.subr.mxu0 0.0
  %928 = vmatpush1.msra.mxu0 0.0
  %929 = vmatprep.subr.mxu0 0.0
  %930 = vmatpush1.msra.mxu0 0.0
  %931 = vmatprep.subr.mxu0 0.0
  %932 = vmatpush1.msra.mxu0 0.0
  %933 = vmatprep.subr.mxu0 0.0
  %934 = vmatpush1.msra.mxu0 0.0
  %935 = vmatprep.subr.mxu0 0.0
  %936 = vmatpush1.msra.mxu0 0.0
  %937 = vmatprep.subr.mxu0 0.0
  %938 = vmatpush1.msra.mxu0 0.0
  %939 = vmatprep.subr.mxu0 0.0
  %940 = vmatpush1.msra.mxu0 0.0
  %941 = vmatprep.subr.mxu0 0.0
  %942 = vmatpush1.msra.mxu0 0.0
  %943 = vmatprep.subr.mxu0 0.0
  %944 = vmatpush1.msra.mxu0 0.0
  %945 = vmatprep.subr.mxu0 0.0
  %946 = vmatpush1.msra.mxu0 0.0
  %947 = vmatprep.subr.mxu0 0.0
  %948 = vmatpush1.msra.mxu0 0.0
  %949 = vmatprep.subr.mxu0 0.0
  %950 = vmatpush1.msra.mxu0 0.0
  %951 = vmatprep.subr.mxu0 0.0
  %952 = vmatpush1.msra.mxu0 0.0
  %953 = vmatprep.subr.mxu0 0.0
  %954 = vmatpush1.msra.mxu0 0.0
  %955 = vmatprep.subr.mxu0 0.0
  %956 = vmatpush1.msra.mxu0 0.0
  %957 = vmatprep.subr.mxu0 0.0
  %958 = vmatpush1.msra.mxu0 0.0
  %959 = vmatprep.mubr.f32.mxu0 0.0
  %960 = vmatmul.mubr.f32.gmra.mrb[0].mxu0 %v893
  %v961 = vpop.f32.mrb[0].mxu0
  %v962 = vadd.f32 0.0, %v961
  %v963 = vpop.f32.mrb[0].mxu0
  %964 = vdwg.mxu0
  %v965 = vadd.f32 %v181, %v962
  %v966 = vadd.f32 %v965, %v51
  %v967 = vmul.f32 %v966, 0.5
  %v968 = vtanh.pop %v967
  %v969 = vmul.f32 %v968, 0.5
  %v970 = vadd.f32 %v969, 0.5
  %v971 = vtanh.pop %v966
  %v972 = vmul.f32 %v970, %v881
  %974 = vrot.lane.b32.xlu0 %v971, 64
  %v975 = vpop.permute.xlu0 %974
  %v977 = vmul.f32 %v970, %v975
  %979 = vrot.lane.b32.xlu0 %v977, 32
  %v980 = vpop.permute.xlu0 %979
  %v982 = vadd.f32 %v972, %v980
  %v983 = vtanh.pop %v982
  %985 = vrot.lane.b32.xlu0 %v983, 64
  %v986 = vpop.permute.xlu0 %985
  %v988 = vmul.f32 %v970, %v986
  %990 = vrot.lane.b32.xlu0 %v988, 32
  %v991 = vpop.permute.xlu0 %990
  %993 = vst.msk [vmem:[#allocation2 + $0x38] sm:$0xff] %vm184, %v991
  %v994 = vld [vmem:[#allocation2] sm:$0xff]
  %v995 = vld [vmem:[#allocation2 + $0x8] sm:$0xff]
  %v996 = vld [vmem:[#allocation2 + $0x10] sm:$0xff]
  %v997 = vld [vmem:[#allocation2 + $0x18] sm:$0xff]
  %v998 = vld [vmem:[#allocation2 + $0x20] sm:$0xff]
  %v999 = vld [vmem:[#allocation2 + $0x28] sm:$0xff]
  %v1000 = vld [vmem:[#allocation2 + $0x30] sm:$0xff]
  %v1001 = vld [vmem:[#allocation2 + $0x38] sm:$0xff]
  %v1002 = vld [vmem:[%s5] sm:$0xff]
  %v1003 = vld [vmem:[%s5 + $0x8] sm:$0xff]
  %v1004 = vld [vmem:[%s5 + $0x10] sm:$0xff]
  %v1005 = vld [vmem:[%s5 + $0x18] sm:$0xff]
  %v1006 = vld [vmem:[%s6] sm:$0x1]
  %v1008 = vlaneseq
  %v1009 = vshrl.u32 %v1008, 7
  %v1010 = vsub.s32 0, %v1009
  %v1011 = vrot.slane %v1006, %v1010
  %v1013 = vld [vmem:[%s4] sm:$0xff]
  %v1014 = vld [vmem:[%s4 + $0x8] sm:$0xff]
  %v1015 = vld [vmem:[%s4 + $0x10] sm:$0xff]
  %v1016 = vld [vmem:[%s4 + $0x18] sm:$0xff]
  %v1018 = vsel %vm184, %v994, 0
  %v1021 = vsel %vm184, %v995, 0
  %v1024 = vsel %vm184, %v996, 0
  %v1027 = vsel %vm184, %v997, 0
  %v1030 = vsel %vm184, %v998, 0
  %v1033 = vsel %vm184, %v999, 0
  %v1036 = vsel %vm184, %v1000, 0
  %v1039 = vsel %vm184, %v1001, 0
  %1041 = vmatprep.subr.mxu0 0.0
  %1042 = vmatpush1.msra.mxu0 %v1013
  %1043 = vmatprep.subr.mxu0 0.0
  %1044 = vmatpush1.msra.mxu0 %v1014
  %1045 = vmatprep.subr.mxu0 0.0
  %1046 = vmatpush1.msra.mxu0 %v1015
  %1047 = vmatprep.subr.mxu0 0.0
  %1048 = vmatpush1.msra.mxu0 %v1016
  %1049 = vmatprep.subr.mxu0 0.0
  %1050 = vmatpush1.msra.mxu0 0.0
  %1051 = vmatprep.subr.mxu0 0.0
  %1052 = vmatpush1.msra.mxu0 0.0
  %1053 = vmatprep.subr.mxu0 0.0
  %1054 = vmatpush1.msra.mxu0 0.0
  %1055 = vmatprep.subr.mxu0 0.0
  %1056 = vmatpush1.msra.mxu0 0.0
  %1057 = vmatprep.subr.mxu0 0.0
  %1058 = vmatpush1.msra.mxu0 0.0
  %1059 = vmatprep.subr.mxu0 0.0
  %1060 = vmatpush1.msra.mxu0 0.0
  %1061 = vmatprep.subr.mxu0 0.0
  %1062 = vmatpush1.msra.mxu0 0.0
  %1063 = vmatprep.subr.mxu0 0.0
  %1064 = vmatpush1.msra.mxu0 0.0
  %1065 = vmatprep.subr.mxu0 0.0
  %1066 = vmatpush1.msra.mxu0 0.0
  %1067 = vmatprep.subr.mxu0 0.0
  %1068 = vmatpush1.msra.mxu0 0.0
  %1069 = vmatprep.subr.mxu0 0.0
  %1070 = vmatpush1.msra.mxu0 0.0
  %1071 = vmatprep.subr.mxu0 0.0
  %1072 = vmatpush1.msra.mxu0 0.0
  %1073 = vmatprep.subr.mxu0 0.0
  %1074 = vmatpush1.msra.mxu0 0.0
  %1075 = vmatprep.subr.mxu0 0.0
  %1076 = vmatpush1.msra.mxu0 0.0
  %1077 = vmatprep.subr.mxu0 0.0
  %1078 = vmatpush1.msra.mxu0 0.0
  %1079 = vmatprep.subr.mxu0 0.0
  %1080 = vmatpush1.msra.mxu0 0.0
  %1081 = vmatprep.subr.mxu0 0.0
  %1082 = vmatpush1.msra.mxu0 0.0
  %1083 = vmatprep.subr.mxu0 0.0
  %1084 = vmatpush1.msra.mxu0 0.0
  %1085 = vmatprep.subr.mxu0 0.0
  %1086 = vmatpush1.msra.mxu0 0.0
  %1087 = vmatprep.subr.mxu0 0.0
  %1088 = vmatpush1.msra.mxu0 0.0
  %1089 = vmatprep.subr.mxu0 0.0
  %1090 = vmatpush1.msra.mxu0 0.0
  %1091 = vmatprep.subr.mxu0 0.0
  %1092 = vmatpush1.msra.mxu0 0.0
  %1093 = vmatprep.subr.mxu0 0.0
  %1094 = vmatpush1.msra.mxu0 0.0
  %1095 = vmatprep.subr.mxu0 0.0
  %1096 = vmatpush1.msra.mxu0 0.0
  %1097 = vmatprep.subr.mxu0 0.0
  %1098 = vmatpush1.msra.mxu0 0.0
  %1099 = vmatprep.subr.mxu0 0.0
  %1100 = vmatpush1.msra.mxu0 0.0
  %1101 = vmatprep.subr.mxu0 0.0
  %1102 = vmatpush1.msra.mxu0 0.0
  %1103 = vmatprep.subr.mxu0 0.0
  %1104 = vmatpush1.msra.mxu0 0.0
  %1105 = vmatprep.mubr.f32.mxu0 0.0
  %1106 = vmatmul.mubr.f32.gmra.mrb[0].mxu0 %v1018
  %v1107 = vpop.f32.mrb[0].mxu0
  %v1108 = vadd.f32 0.0, %v1107
  %v1109 = vpop.f32.mrb[0].mxu0
  %1110 = vmatprep.mubr.f32.mxu0 0.0
  %1111 = vmatmul.mubr.f32.gmra.mrb[0].mxu0 %v1021
  %v1112 = vpop.f32.mrb[0].mxu0
  %v1113 = vadd.f32 0.0, %v1112
  %v1114 = vpop.f32.mrb[0].mxu0
  %1115 = vmatprep.mubr.f32.mxu0 0.0
  %1116 = vmatmul.mubr.f32.gmra.mrb[0].mxu0 %v1024
  %v1117 = vpop.f32.mrb[0].mxu0
  %v1118 = vadd.f32 0.0, %v1117
  %v1119 = vpop.f32.mrb[0].mxu0
  %1120 = vmatprep.mubr.f32.mxu0 0.0
  %1121 = vmatmul.mubr.f32.gmra.mrb[0].mxu0 %v1027
  %v1122 = vpop.f32.mrb[0].mxu0
  %v1123 = vadd.f32 0.0, %v1122
  %v1124 = vpop.f32.mrb[0].mxu0
  %1125 = vmatprep.mubr.f32.mxu0 0.0
  %1126 = vmatmul.mubr.f32.gmra.mrb[0].mxu0 %v1030
  %v1127 = vpop.f32.mrb[0].mxu0
  %v1128 = vadd.f32 0.0, %v1127
  %v1129 = vpop.f32.mrb[0].mxu0
  %1130 = vmatprep.mubr.f32.mxu0 0.0
  %1131 = vmatmul.mubr.f32.gmra.mrb[0].mxu0 %v1033
  %v1132 = vpop.f32.mrb[0].mxu0
  %v1133 = vadd.f32 0.0, %v1132
  %v1134 = vpop.f32.mrb[0].mxu0
  %1135 = vmatprep.mubr.f32.mxu0 0.0
  %1136 = vmatmul.mubr.f32.gmra.mrb[0].mxu0 %v1036
  %v1137 = vpop.f32.mrb[0].mxu0
  %v1138 = vadd.f32 0.0, %v1137
  %v1139 = vpop.f32.mrb[0].mxu0
  %1140 = vmatprep.mubr.f32.mxu0 0.0
  %1141 = vmatmul.mubr.f32.gmra.mrb[0].mxu0 %v1039
  %v1142 = vpop.f32.mrb[0].mxu0
  %v1143 = vadd.f32 0.0, %v1142
  %v1144 = vpop.f32.mrb[0].mxu0
  %1145 = vdwg.mxu0
  %1146 = vmatprep.subr.mxu0 0.0
  %1147 = vmatpush1.msra.mxu0 %v1002
  %1148 = vmatprep.subr.mxu0 0.0
  %1149 = vmatpush1.msra.mxu0 %v1003
  %1150 = vmatprep.subr.mxu0 0.0
  %1151 = vmatpush1.msra.mxu0 %v1004
  %1152 = vmatprep.subr.mxu0 0.0
  %1153 = vmatpush1.msra.mxu0 %v1005
  %1154 = vmatprep.subr.mxu0 0.0
  %1155 = vmatpush1.msra.mxu0 0.0
  %1156 = vmatprep.subr.mxu0 0.0
  %1157 = vmatpush1.msra.mxu0 0.0
  %1158 = vmatprep.subr.mxu0 0.0
  %1159 = vmatpush1.msra.mxu0 0.0
  %1160 = vmatprep.subr.mxu0 0.0
  %1161 = vmatpush1.msra.mxu0 0.0
  %1162 = vmatprep.subr.mxu0 0.0
  %1163 = vmatpush1.msra.mxu0 0.0
  %1164 = vmatprep.subr.mxu0 0.0
  %1165 = vmatpush1.msra.mxu0 0.0
  %1166 = vmatprep.subr.mxu0 0.0
  %1167 = vmatpush1.msra.mxu0 0.0
  %1168 = vmatprep.subr.mxu0 0.0
  %1169 = vmatpush1.msra.mxu0 0.0
  %1170 = vmatprep.subr.mxu0 0.0
  %1171 = vmatpush1.msra.mxu0 0.0
  %1172 = vmatprep.subr.mxu0 0.0
  %1173 = vmatpush1.msra.mxu0 0.0
  %1174 = vmatprep.subr.mxu0 0.0
  %1175 = vmatpush1.msra.mxu0 0.0
  %1176 = vmatprep.subr.mxu0 0.0
  %1177 = vmatpush1.msra.mxu0 0.0
  %1178 = vmatprep.subr.mxu0 0.0
  %1179 = vmatpush1.msra.mxu0 0.0
  %1180 = vmatprep.subr.mxu0 0.0
  %1181 = vmatpush1.msra.mxu0 0.0
  %1182 = vmatprep.subr.mxu0 0.0
  %1183 = vmatpush1.msra.mxu0 0.0
  %1184 = vmatprep.subr.mxu0 0.0
  %1185 = vmatpush1.msra.mxu0 0.0
  %1186 = vmatprep.subr.mxu0 0.0
  %1187 = vmatpush1.msra.mxu0 0.0
  %1188 = vmatprep.subr.mxu0 0.0
  %1189 = vmatpush1.msra.mxu0 0.0
  %1190 = vmatprep.subr.mxu0 0.0
  %1191 = vmatpush1.msra.mxu0 0.0
  %1192 = vmatprep.subr.mxu0 0.0
  %1193 = vmatpush1.msra.mxu0 0.0
  %1194 = vmatprep.subr.mxu0 0.0
  %1195 = vmatpush1.msra.mxu0 0.0
  %1196 = vmatprep.subr.mxu0 0.0
  %1197 = vmatpush1.msra.mxu0 0.0
  %1198 = vmatprep.subr.mxu0 0.0
  %1199 = vmatpush1.msra.mxu0 0.0
  %1200 = vmatprep.subr.mxu0 0.0
  %1201 = vmatpush1.msra.mxu0 0.0
  %1202 = vmatprep.subr.mxu0 0.0
  %1203 = vmatpush1.msra.mxu0 0.0
  %1204 = vmatprep.subr.mxu0 0.0
  %1205 = vmatpush1.msra.mxu0 0.0
  %1206 = vmatprep.subr.mxu0 0.0
  %1207 = vmatpush1.msra.mxu0 0.0
  %1208 = vmatprep.subr.mxu0 0.0
  %1209 = vmatpush1.msra.mxu0 0.0
  %1210 = vmatprep.mubr.f32.mxu0 0.0
  %1211 = vmatmul.mubr.f32.gmra.mrb[0].mxu0 %v186
  %v1212 = vpop.f32.mrb[0].mxu0
  %v1213 = vadd.f32 0.0, %v1212
  %v1214 = vpop.f32.mrb[0].mxu0
  %1215 = vdwg.mxu0
  %v1216 = vadd.f32 %v1108, %v1213
  %v1217 = vadd.f32 %v1216, %v1011
  %v1218 = vmul.f32 %v1217, 0.5
  %v1219 = vtanh.pop %v1218
  %v1220 = vmul.f32 %v1219, 0.5
  %v1221 = vadd.f32 %v1220, 0.5
  %v1222 = vtanh.pop %v1217
  %v1223 = vmul.f32 %v1221, 0.0
  %1225 = vrot.lane.b32.xlu0 %v1222, 64
  %v1226 = vpop.permute.xlu0 %1225
  %v1228 = vmul.f32 %v1221, %v1226
  %1230 = vrot.lane.b32.xlu0 %v1228, 32
  %v1231 = vpop.permute.xlu0 %1230
  %v1233 = vadd.f32 %v1223, %v1231
  %v1234 = vtanh.pop %v1233
  %1236 = vrot.lane.b32.xlu0 %v1234, 64
  %v1237 = vpop.permute.xlu0 %1236
  %v1239 = vmul.f32 %v1221, %v1237
  %1241 = vrot.lane.b32.xlu0 %v1239, 32
  %v1242 = vpop.permute.xlu0 %1241
  %1244 = vst.msk [vmem:[#allocation2] sm:$0xff] %vm184, %v1242
  %v1245 = vsel %vm184, %v1242, 0
  %1247 = vmatprep.subr.mxu0 0.0
  %1248 = vmatpush1.msra.mxu0 %v1002
  %1249 = vmatprep.subr.mxu0 0.0
  %1250 = vmatpush1.msra.mxu0 %v1003
  %1251 = vmatprep.subr.mxu0 0.0
  %1252 = vmatpush1.msra.mxu0 %v1004
  %1253 = vmatprep.subr.mxu0 0.0
  %1254 = vmatpush1.msra.mxu0 %v1005
  %1255 = vmatprep.subr.mxu0 0.0
  %1256 = vmatpush1.msra.mxu0 0.0
  %1257 = vmatprep.subr.mxu0 0.0
  %1258 = vmatpush1.msra.mxu0 0.0
  %1259 = vmatprep.subr.mxu0 0.0
  %1260 = vmatpush1.msra.mxu0 0.0
  %1261 = vmatprep.subr.mxu0 0.0
  %1262 = vmatpush1.msra.mxu0 0.0
  %1263 = vmatprep.subr.mxu0 0.0
  %1264 = vmatpush1.msra.mxu0 0.0
  %1265 = vmatprep.subr.mxu0 0.0
  %1266 = vmatpush1.msra.mxu0 0.0
  %1267 = vmatprep.subr.mxu0 0.0
  %1268 = vmatpush1.msra.mxu0 0.0
  %1269 = vmatprep.subr.mxu0 0.0
  %1270 = vmatpush1.msra.mxu0 0.0
  %1271 = vmatprep.subr.mxu0 0.0
  %1272 = vmatpush1.msra.mxu0 0.0
  %1273 = vmatprep.subr.mxu0 0.0
  %1274 = vmatpush1.msra.mxu0 0.0
  %1275 = vmatprep.subr.mxu0 0.0
  %1276 = vmatpush1.msra.mxu0 0.0
  %1277 = vmatprep.subr.mxu0 0.0
  %1278 = vmatpush1.msra.mxu0 0.0
  %1279 = vmatprep.subr.mxu0 0.0
  %1280 = vmatpush1.msra.mxu0 0.0
  %1281 = vmatprep.subr.mxu0 0.0
  %1282 = vmatpush1.msra.mxu0 0.0
  %1283 = vmatprep.subr.mxu0 0.0
  %1284 = vmatpush1.msra.mxu0 0.0
  %1285 = vmatprep.subr.mxu0 0.0
  %1286 = vmatpush1.msra.mxu0 0.0
  %1287 = vmatprep.subr.mxu0 0.0
  %1288 = vmatpush1.msra.mxu0 0.0
  %1289 = vmatprep.subr.mxu0 0.0
  %1290 = vmatpush1.msra.mxu0 0.0
  %1291 = vmatprep.subr.mxu0 0.0
  %1292 = vmatpush1.msra.mxu0 0.0
  %1293 = vmatprep.subr.mxu0 0.0
  %1294 = vmatpush1.msra.mxu0 0.0
  %1295 = vmatprep.subr.mxu0 0.0
  %1296 = vmatpush1.msra.mxu0 0.0
  %1297 = vmatprep.subr.mxu0 0.0
  %1298 = vmatpush1.msra.mxu0 0.0
  %1299 = vmatprep.subr.mxu0 0.0
  %1300 = vmatpush1.msra.mxu0 0.0
  %1301 = vmatprep.subr.mxu0 0.0
  %1302 = vmatpush1.msra.mxu0 0.0
  %1303 = vmatprep.subr.mxu0 0.0
  %1304 = vmatpush1.msra.mxu0 0.0
  %1305 = vmatprep.subr.mxu0 0.0
  %1306 = vmatpush1.msra.mxu0 0.0
  %1307 = vmatprep.subr.mxu0 0.0
  %1308 = vmatpush1.msra.mxu0 0.0
  %1309 = vmatprep.subr.mxu0 0.0
  %1310 = vmatpush1.msra.mxu0 0.0
  %1311 = vmatprep.mubr.f32.mxu0 0.0
  %1312 = vmatmul.mubr.f32.gmra.mrb[0].mxu0 %v1245
  %v1313 = vpop.f32.mrb[0].mxu0
  %v1314 = vadd.f32 0.0, %v1313
  %v1315 = vpop.f32.mrb[0].mxu0
  %1316 = vdwg.mxu0
  %v1317 = vadd.f32 %v1113, %v1314
  %v1318 = vadd.f32 %v1317, %v1011
  %v1319 = vmul.f32 %v1318, 0.5
  %v1320 = vtanh.pop %v1319
  %v1321 = vmul.f32 %v1320, 0.5
  %v1322 = vadd.f32 %v1321, 0.5
  %v1323 = vtanh.pop %v1318
  %v1324 = vmul.f32 %v1322, %v1233
  %1326 = vrot.lane.b32.xlu0 %v1323, 64
  %v1327 = vpop.permute.xlu0 %1326
  %v1329 = vmul.f32 %v1322, %v1327
  %1331 = vrot.lane.b32.xlu0 %v1329, 32
  %v1332 = vpop.permute.xlu0 %1331
  %v1334 = vadd.f32 %v1324, %v1332
  %v1335 = vtanh.pop %v1334
  %1337 = vrot.lane.b32.xlu0 %v1335, 64
  %v1338 = vpop.permute.xlu0 %1337
  %v1340 = vmul.f32 %v1322, %v1338
  %1342 = vrot.lane.b32.xlu0 %v1340, 32
  %v1343 = vpop.permute.xlu0 %1342
  %1345 = vst.msk [vmem:[#allocation2 + $0x8] sm:$0xff] %vm184, %v1343
  %v1346 = vsel %vm184, %v1343, 0
  %1348 = vmatprep.subr.mxu0 0.0
  %1349 = vmatpush1.msra.mxu0 %v1002
  %1350 = vmatprep.subr.mxu0 0.0
  %1351 = vmatpush1.msra.mxu0 %v1003
  %1352 = vmatprep.subr.mxu0 0.0
  %1353 = vmatpush1.msra.mxu0 %v1004
  %1354 = vmatprep.subr.mxu0 0.0
  %1355 = vmatpush1.msra.mxu0 %v1005
  %1356 = vmatprep.subr.mxu0 0.0
  %1357 = vmatpush1.msra.mxu0 0.0
  %1358 = vmatprep.subr.mxu0 0.0
  %1359 = vmatpush1.msra.mxu0 0.0
  %1360 = vmatprep.subr.mxu0 0.0
  %1361 = vmatpush1.msra.mxu0 0.0
  %1362 = vmatprep.subr.mxu0 0.0
  %1363 = vmatpush1.msra.mxu0 0.0
  %1364 = vmatprep.subr.mxu0 0.0
  %1365 = vmatpush1.msra.mxu0 0.0
  %1366 = vmatprep.subr.mxu0 0.0
  %1367 = vmatpush1.msra.mxu0 0.0
  %1368 = vmatprep.subr.mxu0 0.0
  %1369 = vmatpush1.msra.mxu0 0.0
  %1370 = vmatprep.subr.mxu0 0.0
  %1371 = vmatpush1.msra.mxu0 0.0
  %1372 = vmatprep.subr.mxu0 0.0
  %1373 = vmatpush1.msra.mxu0 0.0
  %1374 = vmatprep.subr.mxu0 0.0
  %1375 = vmatpush1.msra.mxu0 0.0
  %1376 = vmatprep.subr.mxu0 0.0
  %1377 = vmatpush1.msra.mxu0 0.0
  %1378 = vmatprep.subr.mxu0 0.0
  %1379 = vmatpush1.msra.mxu0 0.0
  %1380 = vmatprep.subr.mxu0 0.0
  %1381 = vmatpush1.msra.mxu0 0.0
  %1382 = vmatprep.subr.mxu0 0.0
  %1383 = vmatpush1.msra.mxu0 0.0
  %1384 = vmatprep.subr.mxu0 0.0
  %1385 = vmatpush1.msra.mxu0 0.0
  %1386 = vmatprep.subr.mxu0 0.0
  %1387 = vmatpush1.msra.mxu0 0.0
  %1388 = vmatprep.subr.mxu0 0.0
  %1389 = vmatpush1.msra.mxu0 0.0
  %1390 = vmatprep.subr.mxu0 0.0
  %1391 = vmatpush1.msra.mxu0 0.0
  %1392 = vmatprep.subr.mxu0 0.0
  %1393 = vmatpush1.msra.mxu0 0.0
  %1394 = vmatprep.subr.mxu0 0.0
  %1395 = vmatpush1.msra.mxu0 0.0
  %1396 = vmatprep.subr.mxu0 0.0
  %1397 = vmatpush1.msra.mxu0 0.0
  %1398 = vmatprep.subr.mxu0 0.0
  %1399 = vmatpush1.msra.mxu0 0.0
  %1400 = vmatprep.subr.mxu0 0.0
  %1401 = vmatpush1.msra.mxu0 0.0
  %1402 = vmatprep.subr.mxu0 0.0
  %1403 = vmatpush1.msra.mxu0 0.0
  %1404 = vmatprep.subr.mxu0 0.0
  %1405 = vmatpush1.msra.mxu0 0.0
  %1406 = vmatprep.subr.mxu0 0.0
  %1407 = vmatpush1.msra.mxu0 0.0
  %1408 = vmatprep.subr.mxu0 0.0
  %1409 = vmatpush1.msra.mxu0 0.0
  %1410 = vmatprep.subr.mxu0 0.0
  %1411 = vmatpush1.msra.mxu0 0.0
  %1412 = vmatprep.mubr.f32.mxu0 0.0
  %1413 = vmatmul.mubr.f32.gmra.mrb[0].mxu0 %v1346
  %v1414 = vpop.f32.mrb[0].mxu0
  %v1415 = vadd.f32 0.0, %v1414
  %v1416 = vpop.f32.mrb[0].mxu0
  %1417 = vdwg.mxu0
  %v1418 = vadd.f32 %v1118, %v1415
  %v1419 = vadd.f32 %v1418, %v1011
  %v1420 = vmul.f32 %v1419, 0.5
  %v1421 = vtanh.pop %v1420
  %v1422 = vmul.f32 %v1421, 0.5
  %v1423 = vadd.f32 %v1422, 0.5
  %v1424 = vtanh.pop %v1419
  %v1425 = vmul.f32 %v1423, %v1334
  %1427 = vrot.lane.b32.xlu0 %v1424, 64
  %v1428 = vpop.permute.xlu0 %1427
  %v1430 = vmul.f32 %v1423, %v1428
  %1432 = vrot.lane.b32.xlu0 %v1430, 32
  %v1433 = vpop.permute.xlu0 %1432
  %v1435 = vadd.f32 %v1425, %v1433
  %v1436 = vtanh.pop %v1435
  %1438 = vrot.lane.b32.xlu0 %v1436, 64
  %v1439 = vpop.permute.xlu0 %1438
  %v1441 = vmul.f32 %v1423, %v1439
  %1443 = vrot.lane.b32.xlu0 %v1441, 32
  %v1444 = vpop.permute.xlu0 %1443
  %1446 = vst.msk [vmem:[#allocation2 + $0x10] sm:$0xff] %vm184, %v1444
  %v1447 = vsel %vm184, %v1444, 0
  %1449 = vmatprep.subr.mxu0 0.0
  %1450 = vmatpush1.msra.mxu0 %v1002
  %1451 = vmatprep.subr.mxu0 0.0
  %1452 = vmatpush1.msra.mxu0 %v1003
  %1453 = vmatprep.subr.mxu0 0.0
  %1454 = vmatpush1.msra.mxu0 %v1004
  %1455 = vmatprep.subr.mxu0 0.0
  %1456 = vmatpush1.msra.mxu0 %v1005
  %1457 = vmatprep.subr.mxu0 0.0
  %1458 = vmatpush1.msra.mxu0 0.0
  %1459 = vmatprep.subr.mxu0 0.0
  %1460 = vmatpush1.msra.mxu0 0.0
  %1461 = vmatprep.subr.mxu0 0.0
  %1462 = vmatpush1.msra.mxu0 0.0
  %1463 = vmatprep.subr.mxu0 0.0
  %1464 = vmatpush1.msra.mxu0 0.0
  %1465 = vmatprep.subr.mxu0 0.0
  %1466 = vmatpush1.msra.mxu0 0.0
  %1467 = vmatprep.subr.mxu0 0.0
  %1468 = vmatpush1.msra.mxu0 0.0
  %1469 = vmatprep.subr.mxu0 0.0
  %1470 = vmatpush1.msra.mxu0 0.0
  %1471 = vmatprep.subr.mxu0 0.0
  %1472 = vmatpush1.msra.mxu0 0.0
  %1473 = vmatprep.subr.mxu0 0.0
  %1474 = vmatpush1.msra.mxu0 0.0
  %1475 = vmatprep.subr.mxu0 0.0
  %1476 = vmatpush1.msra.mxu0 0.0
  %1477 = vmatprep.subr.mxu0 0.0
  %1478 = vmatpush1.msra.mxu0 0.0
  %1479 = vmatprep.subr.mxu0 0.0
  %1480 = vmatpush1.msra.mxu0 0.0
  %1481 = vmatprep.subr.mxu0 0.0
  %1482 = vmatpush1.msra.mxu0 0.0
  %1483 = vmatprep.subr.mxu0 0.0
  %1484 = vmatpush1.msra.mxu0 0.0
  %1485 = vmatprep.subr.mxu0 0.0
  %1486 = vmatpush1.msra.mxu0 0.0
  %1487 = vmatprep.subr.mxu0 0.0
  %1488 = vmatpush1.msra.mxu0 0.0
  %1489 = vmatprep.subr.mxu0 0.0
  %1490 = vmatpush1.msra.mxu0 0.0
  %1491 = vmatprep.subr.mxu0 0.0
  %1492 = vmatpush1.msra.mxu0 0.0
  %1493 = vmatprep.subr.mxu0 0.0
  %1494 = vmatpush1.msra.mxu0 0.0
  %1495 = vmatprep.subr.mxu0 0.0
  %1496 = vmatpush1.msra.mxu0 0.0
  %1497 = vmatprep.subr.mxu0 0.0
  %1498 = vmatpush1.msra.mxu0 0.0
  %1499 = vmatprep.subr.mxu0 0.0
  %1500 = vmatpush1.msra.mxu0 0.0
  %1501 = vmatprep.subr.mxu0 0.0
  %1502 = vmatpush1.msra.mxu0 0.0
  %1503 = vmatprep.subr.mxu0 0.0
  %1504 = vmatpush1.msra.mxu0 0.0
  %1505 = vmatprep.subr.mxu0 0.0
  %1506 = vmatpush1.msra.mxu0 0.0
  %1507 = vmatprep.subr.mxu0 0.0
  %1508 = vmatpush1.msra.mxu0 0.0
  %1509 = vmatprep.subr.mxu0 0.0
  %1510 = vmatpush1.msra.mxu0 0.0
  %1511 = vmatprep.subr.mxu0 0.0
  %1512 = vmatpush1.msra.mxu0 0.0
  %1513 = vmatprep.mubr.f32.mxu0 0.0
  %1514 = vmatmul.mubr.f32.gmra.mrb[0].mxu0 %v1447
  %v1515 = vpop.f32.mrb[0].mxu0
  %v1516 = vadd.f32 0.0, %v1515
  %v1517 = vpop.f32.mrb[0].mxu0
  %1518 = vdwg.mxu0
  %v1519 = vadd.f32 %v1123, %v1516
  %v1520 = vadd.f32 %v1519, %v1011
  %v1521 = vmul.f32 %v1520, 0.5
  %v1522 = vtanh.pop %v1521
  %v1523 = vmul.f32 %v1522, 0.5
  %v1524 = vadd.f32 %v1523, 0.5
  %v1525 = vtanh.pop %v1520
  %v1526 = vmul.f32 %v1524, %v1435
  %1528 = vrot.lane.b32.xlu0 %v1525, 64
  %v1529 = vpop.permute.xlu0 %1528
  %v1531 = vmul.f32 %v1524, %v1529
  %1533 = vrot.lane.b32.xlu0 %v1531, 32
  %v1534 = vpop.permute.xlu0 %1533
  %v1536 = vadd.f32 %v1526, %v1534
  %v1537 = vtanh.pop %v1536
  %1539 = vrot.lane.b32.xlu0 %v1537, 64
  %v1540 = vpop.permute.xlu0 %1539
  %v1542 = vmul.f32 %v1524, %v1540
  %1544 = vrot.lane.b32.xlu0 %v1542, 32
  %v1545 = vpop.permute.xlu0 %1544
  %1547 = vst.msk [vmem:[#allocation2 + $0x18] sm:$0xff] %vm184, %v1545
  %v1548 = vsel %vm184, %v1545, 0
  %1550 = vmatprep.subr.mxu0 0.0
  %1551 = vmatpush1.msra.mxu0 %v1002
  %1552 = vmatprep.subr.mxu0 0.0
  %1553 = vmatpush1.msra.mxu0 %v1003
  %1554 = vmatprep.subr.mxu0 0.0
  %1555 = vmatpush1.msra.mxu0 %v1004
  %1556 = vmatprep.subr.mxu0 0.0
  %1557 = vmatpush1.msra.mxu0 %v1005
  %1558 = vmatprep.subr.mxu0 0.0
  %1559 = vmatpush1.msra.mxu0 0.0
  %1560 = vmatprep.subr.mxu0 0.0
  %1561 = vmatpush1.msra.mxu0 0.0
  %1562 = vmatprep.subr.mxu0 0.0
  %1563 = vmatpush1.msra.mxu0 0.0
  %1564 = vmatprep.subr.mxu0 0.0
  %1565 = vmatpush1.msra.mxu0 0.0
  %1566 = vmatprep.subr.mxu0 0.0
  %1567 = vmatpush1.msra.mxu0 0.0
  %1568 = vmatprep.subr.mxu0 0.0
  %1569 = vmatpush1.msra.mxu0 0.0
  %1570 = vmatprep.subr.mxu0 0.0
  %1571 = vmatpush1.msra.mxu0 0.0
  %1572 = vmatprep.subr.mxu0 0.0
  %1573 = vmatpush1.msra.mxu0 0.0
  %1574 = vmatprep.subr.mxu0 0.0
  %1575 = vmatpush1.msra.mxu0 0.0
  %1576 = vmatprep.subr.mxu0 0.0
  %1577 = vmatpush1.msra.mxu0 0.0
  %1578 = vmatprep.subr.mxu0 0.0
  %1579 = vmatpush1.msra.mxu0 0.0
  %1580 = vmatprep.subr.mxu0 0.0
  %1581 = vmatpush1.msra.mxu0 0.0
  %1582 = vmatprep.subr.mxu0 0.0
  %1583 = vmatpush1.msra.mxu0 0.0
  %1584 = vmatprep.subr.mxu0 0.0
  %1585 = vmatpush1.msra.mxu0 0.0
  %1586 = vmatprep.subr.mxu0 0.0
  %1587 = vmatpush1.msra.mxu0 0.0
  %1588 = vmatprep.subr.mxu0 0.0
  %1589 = vmatpush1.msra.mxu0 0.0
  %1590 = vmatprep.subr.mxu0 0.0
  %1591 = vmatpush1.msra.mxu0 0.0
  %1592 = vmatprep.subr.mxu0 0.0
  %1593 = vmatpush1.msra.mxu0 0.0
  %1594 = vmatprep.subr.mxu0 0.0
  %1595 = vmatpush1.msra.mxu0 0.0
  %1596 = vmatprep.subr.mxu0 0.0
  %1597 = vmatpush1.msra.mxu0 0.0
  %1598 = vmatprep.subr.mxu0 0.0
  %1599 = vmatpush1.msra.mxu0 0.0
  %1600 = vmatprep.subr.mxu0 0.0
  %1601 = vmatpush1.msra.mxu0 0.0
  %1602 = vmatprep.subr.mxu0 0.0
  %1603 = vmatpush1.msra.mxu0 0.0
  %1604 = vmatprep.subr.mxu0 0.0
  %1605 = vmatpush1.msra.mxu0 0.0
  %1606 = vmatprep.subr.mxu0 0.0
  %1607 = vmatpush1.msra.mxu0 0.0
  %1608 = vmatprep.subr.mxu0 0.0
  %1609 = vmatpush1.msra.mxu0 0.0
  %1610 = vmatprep.subr.mxu0 0.0
  %1611 = vmatpush1.msra.mxu0 0.0
  %1612 = vmatprep.subr.mxu0 0.0
  %1613 = vmatpush1.msra.mxu0 0.0
  %1614 = vmatprep.mubr.f32.mxu0 0.0
  %1615 = vmatmul.mubr.f32.gmra.mrb[0].mxu0 %v1548
  %v1616 = vpop.f32.mrb[0].mxu0
  %v1617 = vadd.f32 0.0, %v1616
  %v1618 = vpop.f32.mrb[0].mxu0
  %1619 = vdwg.mxu0
  %v1620 = vadd.f32 %v1128, %v1617
  %v1621 = vadd.f32 %v1620, %v1011
  %v1622 = vmul.f32 %v1621, 0.5
  %v1623 = vtanh.pop %v1622
  %v1624 = vmul.f32 %v1623, 0.5
  %v1625 = vadd.f32 %v1624, 0.5
  %v1626 = vtanh.pop %v1621
  %v1627 = vmul.f32 %v1625, %v1536
  %1629 = vrot.lane.b32.xlu0 %v1626, 64
  %v1630 = vpop.permute.xlu0 %1629
  %v1632 = vmul.f32 %v1625, %v1630
  %1634 = vrot.lane.b32.xlu0 %v1632, 32
  %v1635 = vpop.permute.xlu0 %1634
  %v1637 = vadd.f32 %v1627, %v1635
  %v1638 = vtanh.pop %v1637
  %1640 = vrot.lane.b32.xlu0 %v1638, 64
  %v1641 = vpop.permute.xlu0 %1640
  %v1643 = vmul.f32 %v1625, %v1641
  %1645 = vrot.lane.b32.xlu0 %v1643, 32
  %v1646 = vpop.permute.xlu0 %1645
  %1648 = vst.msk [vmem:[#allocation2 + $0x20] sm:$0xff] %vm184, %v1646
  %v1649 = vsel %vm184, %v1646, 0
  %1651 = vmatprep.subr.mxu0 0.0
  %1652 = vmatpush1.msra.mxu0 %v1002
  %1653 = vmatprep.subr.mxu0 0.0
  %1654 = vmatpush1.msra.mxu0 %v1003
  %1655 = vmatprep.subr.mxu0 0.0
  %1656 = vmatpush1.msra.mxu0 %v1004
  %1657 = vmatprep.subr.mxu0 0.0
  %1658 = vmatpush1.msra.mxu0 %v1005
  %1659 = vmatprep.subr.mxu0 0.0
  %1660 = vmatpush1.msra.mxu0 0.0
  %1661 = vmatprep.subr.mxu0 0.0
  %1662 = vmatpush1.msra.mxu0 0.0
  %1663 = vmatprep.subr.mxu0 0.0
  %1664 = vmatpush1.msra.mxu0 0.0
  %1665 = vmatprep.subr.mxu0 0.0
  %1666 = vmatpush1.msra.mxu0 0.0
  %1667 = vmatprep.subr.mxu0 0.0
  %1668 = vmatpush1.msra.mxu0 0.0
  %1669 = vmatprep.subr.mxu0 0.0
  %1670 = vmatpush1.msra.mxu0 0.0
  %1671 = vmatprep.subr.mxu0 0.0
  %1672 = vmatpush1.msra.mxu0 0.0
  %1673 = vmatprep.subr.mxu0 0.0
  %1674 = vmatpush1.msra.mxu0 0.0
  %1675 = vmatprep.subr.mxu0 0.0
  %1676 = vmatpush1.msra.mxu0 0.0
  %1677 = vmatprep.subr.mxu0 0.0
  %1678 = vmatpush1.msra.mxu0 0.0
  %1679 = vmatprep.subr.mxu0 0.0
  %1680 = vmatpush1.msra.mxu0 0.0
  %1681 = vmatprep.subr.mxu0 0.0
  %1682 = vmatpush1.msra.mxu0 0.0
  %1683 = vmatprep.subr.mxu0 0.0
  %1684 = vmatpush1.msra.mxu0 0.0
  %1685 = vmatprep.subr.mxu0 0.0
  %1686 = vmatpush1.msra.mxu0 0.0
  %1687 = vmatprep.subr.mxu0 0.0
  %1688 = vmatpush1.msra.mxu0 0.0
  %1689 = vmatprep.subr.mxu0 0.0
  %1690 = vmatpush1.msra.mxu0 0.0
  %1691 = vmatprep.subr.mxu0 0.0
  %1692 = vmatpush1.msra.mxu0 0.0
  %1693 = vmatprep.subr.mxu0 0.0
  %1694 = vmatpush1.msra.mxu0 0.0
  %1695 = vmatprep.subr.mxu0 0.0
  %1696 = vmatpush1.msra.mxu0 0.0
  %1697 = vmatprep.subr.mxu0 0.0
  %1698 = vmatpush1.msra.mxu0 0.0
  %1699 = vmatprep.subr.mxu0 0.0
  %1700 = vmatpush1.msra.mxu0 0.0
  %1701 = vmatprep.subr.mxu0 0.0
  %1702 = vmatpush1.msra.mxu0 0.0
  %1703 = vmatprep.subr.mxu0 0.0
  %1704 = vmatpush1.msra.mxu0 0.0
  %1705 = vmatprep.subr.mxu0 0.0
  %1706 = vmatpush1.msra.mxu0 0.0
  %1707 = vmatprep.subr.mxu0 0.0
  %1708 = vmatpush1.msra.mxu0 0.0
  %1709 = vmatprep.subr.mxu0 0.0
  %1710 = vmatpush1.msra.mxu0 0.0
  %1711 = vmatprep.subr.mxu0 0.0
  %1712 = vmatpush1.msra.mxu0 0.0
  %1713 = vmatprep.subr.mxu0 0.0
  %1714 = vmatpush1.msra.mxu0 0.0
  %1715 = vmatprep.mubr.f32.mxu0 0.0
  %1716 = vmatmul.mubr.f32.gmra.mrb[0].mxu0 %v1649
  %v1717 = vpop.f32.mrb[0].mxu0
  %v1718 = vadd.f32 0.0, %v1717
  %v1719 = vpop.f32.mrb[0].mxu0
  %1720 = vdwg.mxu0
  %v1721 = vadd.f32 %v1133, %v1718
  %v1722 = vadd.f32 %v1721, %v1011
  %v1723 = vmul.f32 %v1722, 0.5
  %v1724 = vtanh.pop %v1723
  %v1725 = vmul.f32 %v1724, 0.5
  %v1726 = vadd.f32 %v1725, 0.5
  %v1727 = vtanh.pop %v1722
  %v1728 = vmul.f32 %v1726, %v1637
  %1730 = vrot.lane.b32.xlu0 %v1727, 64
  %v1731 = vpop.permute.xlu0 %1730
  %v1733 = vmul.f32 %v1726, %v1731
  %1735 = vrot.lane.b32.xlu0 %v1733, 32
  %v1736 = vpop.permute.xlu0 %1735
  %v1738 = vadd.f32 %v1728, %v1736
  %v1739 = vtanh.pop %v1738
  %1741 = vrot.lane.b32.xlu0 %v1739, 64
  %v1742 = vpop.permute.xlu0 %1741
  %v1744 = vmul.f32 %v1726, %v1742
  %1746 = vrot.lane.b32.xlu0 %v1744, 32
  %v1747 = vpop.permute.xlu0 %1746
  %1749 = vst.msk [vmem:[#allocation2 + $0x28] sm:$0xff] %vm184, %v1747
  %v1750 = vsel %vm184, %v1747, 0
  %1752 = vmatprep.subr.mxu0 0.0
  %1753 = vmatpush1.msra.mxu0 %v1002
  %1754 = vmatprep.subr.mxu0 0.0
  %1755 = vmatpush1.msra.mxu0 %v1003
  %1756 = vmatprep.subr.mxu0 0.0
  %1757 = vmatpush1.msra.mxu0 %v1004
  %1758 = vmatprep.subr.mxu0 0.0
  %1759 = vmatpush1.msra.mxu0 %v1005
  %1760 = vmatprep.subr.mxu0 0.0
  %1761 = vmatpush1.msra.mxu0 0.0
  %1762 = vmatprep.subr.mxu0 0.0
  %1763 = vmatpush1.msra.mxu0 0.0
  %1764 = vmatprep.subr.mxu0 0.0
  %1765 = vmatpush1.msra.mxu0 0.0
  %1766 = vmatprep.subr.mxu0 0.0
  %1767 = vmatpush1.msra.mxu0 0.0
  %1768 = vmatprep.subr.mxu0 0.0
  %1769 = vmatpush1.msra.mxu0 0.0
  %1770 = vmatprep.subr.mxu0 0.0
  %1771 = vmatpush1.msra.mxu0 0.0
  %1772 = vmatprep.subr.mxu0 0.0
  %1773 = vmatpush1.msra.mxu0 0.0
  %1774 = vmatprep.subr.mxu0 0.0
  %1775 = vmatpush1.msra.mxu0 0.0
  %1776 = vmatprep.subr.mxu0 0.0
  %1777 = vmatpush1.msra.mxu0 0.0
  %1778 = vmatprep.subr.mxu0 0.0
  %1779 = vmatpush1.msra.mxu0 0.0
  %1780 = vmatprep.subr.mxu0 0.0
  %1781 = vmatpush1.msra.mxu0 0.0
  %1782 = vmatprep.subr.mxu0 0.0
  %1783 = vmatpush1.msra.mxu0 0.0
  %1784 = vmatprep.subr.mxu0 0.0
  %1785 = vmatpush1.msra.mxu0 0.0
  %1786 = vmatprep.subr.mxu0 0.0
  %1787 = vmatpush1.msra.mxu0 0.0
  %1788 = vmatprep.subr.mxu0 0.0
  %1789 = vmatpush1.msra.mxu0 0.0
  %1790 = vmatprep.subr.mxu0 0.0
  %1791 = vmatpush1.msra.mxu0 0.0
  %1792 = vmatprep.subr.mxu0 0.0
  %1793 = vmatpush1.msra.mxu0 0.0
  %1794 = vmatprep.subr.mxu0 0.0
  %1795 = vmatpush1.msra.mxu0 0.0
  %1796 = vmatprep.subr.mxu0 0.0
  %1797 = vmatpush1.msra.mxu0 0.0
  %1798 = vmatprep.subr.mxu0 0.0
  %1799 = vmatpush1.msra.mxu0 0.0
  %1800 = vmatprep.subr.mxu0 0.0
  %1801 = vmatpush1.msra.mxu0 0.0
  %1802 = vmatprep.subr.mxu0 0.0
  %1803 = vmatpush1.msra.mxu0 0.0
  %1804 = vmatprep.subr.mxu0 0.0
  %1805 = vmatpush1.msra.mxu0 0.0
  %1806 = vmatprep.subr.mxu0 0.0
  %1807 = vmatpush1.msra.mxu0 0.0
  %1808 = vmatprep.subr.mxu0 0.0
  %1809 = vmatpush1.msra.mxu0 0.0
  %1810 = vmatprep.subr.mxu0 0.0
  %1811 = vmatpush1.msra.mxu0 0.0
  %1812 = vmatprep.subr.mxu0 0.0
  %1813 = vmatpush1.msra.mxu0 0.0
  %1814 = vmatprep.subr.mxu0 0.0
  %1815 = vmatpush1.msra.mxu0 0.0
  %1816 = vmatprep.mubr.f32.mxu0 0.0
  %1817 = vmatmul.mubr.f32.gmra.mrb[0].mxu0 %v1750
  %v1818 = vpop.f32.mrb[0].mxu0
  %v1819 = vadd.f32 0.0, %v1818
  %v1820 = vpop.f32.mrb[0].mxu0
  %1821 = vdwg.mxu0
  %v1822 = vadd.f32 %v1138, %v1819
  %v1823 = vadd.f32 %v1822, %v1011
  %v1824 = vmul.f32 %v1823, 0.5
  %v1825 = vtanh.pop %v1824
  %v1826 = vmul.f32 %v1825, 0.5
  %v1827 = vadd.f32 %v1826, 0.5
  %v1828 = vtanh.pop %v1823
  %v1829 = vmul.f32 %v1827, %v1738
  %1831 = vrot.lane.b32.xlu0 %v1828, 64
  %v1832 = vpop.permute.xlu0 %1831
  %v1834 = vmul.f32 %v1827, %v1832
  %1836 = vrot.lane.b32.xlu0 %v1834, 32
  %v1837 = vpop.permute.xlu0 %1836
  %v1839 = vadd.f32 %v1829, %v1837
  %v1840 = vtanh.pop %v1839
  %1842 = vrot.lane.b32.xlu0 %v1840, 64
  %v1843 = vpop.permute.xlu0 %1842
  %v1845 = vmul.f32 %v1827, %v1843
  %1847 = vrot.lane.b32.xlu0 %v1845, 32
  %v1848 = vpop.permute.xlu0 %1847
  %1850 = vst.msk [vmem:[#allocation2 + $0x30] sm:$0xff] %vm184, %v1848
  %v1851 = vsel %vm184, %v1848, 0
  %1853 = vmatprep.subr.mxu0 0.0
  %1854 = vmatpush1.msra.mxu0 %v1002
  %1855 = vmatprep.subr.mxu0 0.0
  %1856 = vmatpush1.msra.mxu0 %v1003
  %1857 = vmatprep.subr.mxu0 0.0
  %1858 = vmatpush1.msra.mxu0 %v1004
  %1859 = vmatprep.subr.mxu0 0.0
  %1860 = vmatpush1.msra.mxu0 %v1005
  %1861 = vmatprep.subr.mxu0 0.0
  %1862 = vmatpush1.msra.mxu0 0.0
  %1863 = vmatprep.subr.mxu0 0.0
  %1864 = vmatpush1.msra.mxu0 0.0
  %1865 = vmatprep.subr.mxu0 0.0
  %1866 = vmatpush1.msra.mxu0 0.0
  %1867 = vmatprep.subr.mxu0 0.0
  %1868 = vmatpush1.msra.mxu0 0.0
  %1869 = vmatprep.subr.mxu0 0.0
  %1870 = vmatpush1.msra.mxu0 0.0
  %1871 = vmatprep.subr.mxu0 0.0
  %1872 = vmatpush1.msra.mxu0 0.0
  %1873 = vmatprep.subr.mxu0 0.0
  %1874 = vmatpush1.msra.mxu0 0.0
  %1875 = vmatprep.subr.mxu0 0.0
  %1876 = vmatpush1.msra.mxu0 0.0
  %1877 = vmatprep.subr.mxu0 0.0
  %1878 = vmatpush1.msra.mxu0 0.0
  %1879 = vmatprep.subr.mxu0 0.0
  %1880 = vmatpush1.msra.mxu0 0.0
  %1881 = vmatprep.subr.mxu0 0.0
  %1882 = vmatpush1.msra.mxu0 0.0
  %1883 = vmatprep.subr.mxu0 0.0
  %1884 = vmatpush1.msra.mxu0 0.0
  %1885 = vmatprep.subr.mxu0 0.0
  %1886 = vmatpush1.msra.mxu0 0.0
  %1887 = vmatprep.subr.mxu0 0.0
  %1888 = vmatpush1.msra.mxu0 0.0
  %1889 = vmatprep.subr.mxu0 0.0
  %1890 = vmatpush1.msra.mxu0 0.0
  %1891 = vmatprep.subr.mxu0 0.0
  %1892 = vmatpush1.msra.mxu0 0.0
  %1893 = vmatprep.subr.mxu0 0.0
  %1894 = vmatpush1.msra.mxu0 0.0
  %1895 = vmatprep.subr.mxu0 0.0
  %1896 = vmatpush1.msra.mxu0 0.0
  %1897 = vmatprep.subr.mxu0 0.0
  %1898 = vmatpush1.msra.mxu0 0.0
  %1899 = vmatprep.subr.mxu0 0.0
  %1900 = vmatpush1.msra.mxu0 0.0
  %1901 = vmatprep.subr.mxu0 0.0
  %1902 = vmatpush1.msra.mxu0 0.0
  %1903 = vmatprep.subr.mxu0 0.0
  %1904 = vmatpush1.msra.mxu0 0.0
  %1905 = vmatprep.subr.mxu0 0.0
  %1906 = vmatpush1.msra.mxu0 0.0
  %1907 = vmatprep.subr.mxu0 0.0
  %1908 = vmatpush1.msra.mxu0 0.0
  %1909 = vmatprep.subr.mxu0 0.0
  %1910 = vmatpush1.msra.mxu0 0.0
  %1911 = vmatprep.subr.mxu0 0.0
  %1912 = vmatpush1.msra.mxu0 0.0
  %1913 = vmatprep.subr.mxu0 0.0
  %1914 = vmatpush1.msra.mxu0 0.0
  %1915 = vmatprep.subr.mxu0 0.0
  %1916 = vmatpush1.msra.mxu0 0.0
  %1917 = vmatprep.mubr.f32.mxu0 0.0
  %1918 = vmatmul.mubr.f32.gmra.mrb[0].mxu0 %v1851
  %v1919 = vpop.f32.mrb[0].mxu0
  %v1920 = vadd.f32 0.0, %v1919
  %v1921 = vpop.f32.mrb[0].mxu0
  %1922 = vdwg.mxu0
  %v1923 = vadd.f32 %v1143, %v1920
  %v1924 = vadd.f32 %v1923, %v1011
  %v1925 = vmul.f32 %v1924, 0.5
  %v1926 = vtanh.pop %v1925
  %v1927 = vmul.f32 %v1926, 0.5
  %v1928 = vadd.f32 %v1927, 0.5
  %v1929 = vtanh.pop %v1924
  %v1930 = vmul.f32 %v1928, %v1839
  %1932 = vrot.lane.b32.xlu0 %v1929, 64
  %v1933 = vpop.permute.xlu0 %1932
  %v1935 = vmul.f32 %v1928, %v1933
  %1937 = vrot.lane.b32.xlu0 %v1935, 32
  %v1938 = vpop.permute.xlu0 %1937
  %v1940 = vadd.f32 %v1930, %v1938
  %v1941 = vtanh.pop %v1940
  %1943 = vrot.lane.b32.xlu0 %v1941, 64
  %v1944 = vpop.permute.xlu0 %1943
  %v1946 = vmul.f32 %v1928, %v1944
  %1948 = vrot.lane.b32.xlu0 %v1946, 32
  %v1949 = vpop.permute.xlu0 %1948
  %1951 = vst.msk [vmem:[#allocation2 + $0x38] sm:$0xff] %vm184, %v1949
  %v1952 = vld [vmem:[#allocation2] sm:$0xff]
  %v1953 = vld [vmem:[#allocation2 + $0x8] sm:$0xff]
  %v1954 = vld [vmem:[#allocation2 + $0x10] sm:$0xff]
  %v1955 = vld [vmem:[#allocation2 + $0x18] sm:$0xff]
  %v1956 = vld [vmem:[#allocation2 + $0x20] sm:$0xff]
  %v1957 = vld [vmem:[#allocation2 + $0x28] sm:$0xff]
  %v1958 = vld [vmem:[#allocation2 + $0x30] sm:$0xff]
  %v1959 = vld [vmem:[#allocation2 + $0x38] sm:$0xff]
  %v1960 = vld [vmem:[%s7] sm:$0xff]
  %v1961 = vld [vmem:[%s7 + $0x8] sm:$0xff]
  %v1962 = vld [vmem:[%s7 + $0x10] sm:$0xff]
  %v1963 = vld [vmem:[%s7 + $0x18] sm:$0xff]
  %v1964 = vld [vmem:[#allocation3] sm:$0x1]
  %v1966 = vlaneseq
  %v1967 = vshrl.u32 %v1966, 7
  %v1968 = vsub.s32 0, %v1967
  %v1969 = vrot.slane %v1964, %v1968
  %v1972 = vsel %vm184, %v1952, 0
  %v1975 = vsel %vm184, %v1953, 0
  %v1978 = vsel %vm184, %v1954, 0
  %v1981 = vsel %vm184, %v1955, 0
  %v1984 = vsel %vm184, %v1956, 0
  %v1987 = vsel %vm184, %v1957, 0
  %v1990 = vsel %vm184, %v1958, 0
  %v1993 = vsel %vm184, %v1959, 0
  %1995 = vmatprep.subr.mxu0 0.0
  %1996 = vmatpush1.msra.mxu0 %v1960
  %1997 = vmatprep.subr.mxu0 0.0
  %1998 = vmatpush1.msra.mxu0 %v1961
  %1999 = vmatprep.subr.mxu0 0.0
  %2000 = vmatpush1.msra.mxu0 %v1962
  %2001 = vmatprep.subr.mxu0 0.0
  %2002 = vmatpush1.msra.mxu0 %v1963
  %2003 = vmatprep.subr.mxu0 0.0
  %2004 = vmatpush1.msra.mxu0 0.0
  %2005 = vmatprep.subr.mxu0 0.0
  %2006 = vmatpush1.msra.mxu0 0.0
  %2007 = vmatprep.subr.mxu0 0.0
  %2008 = vmatpush1.msra.mxu0 0.0
  %2009 = vmatprep.subr.mxu0 0.0
  %2010 = vmatpush1.msra.mxu0 0.0
  %2011 = vmatprep.subr.mxu0 0.0
  %2012 = vmatpush1.msra.mxu0 0.0
  %2013 = vmatprep.subr.mxu0 0.0
  %2014 = vmatpush1.msra.mxu0 0.0
  %2015 = vmatprep.subr.mxu0 0.0
  %2016 = vmatpush1.msra.mxu0 0.0
  %2017 = vmatprep.subr.mxu0 0.0
  %2018 = vmatpush1.msra.mxu0 0.0
  %2019 = vmatprep.subr.mxu0 0.0
  %2020 = vmatpush1.msra.mxu0 0.0
  %2021 = vmatprep.subr.mxu0 0.0
  %2022 = vmatpush1.msra.mxu0 0.0
  %2023 = vmatprep.subr.mxu0 0.0
  %2024 = vmatpush1.msra.mxu0 0.0
  %2025 = vmatprep.subr.mxu0 0.0
  %2026 = vmatpush1.msra.mxu0 0.0
  %2027 = vmatprep.subr.mxu0 0.0
  %2028 = vmatpush1.msra.mxu0 0.0
  %2029 = vmatprep.subr.mxu0 0.0
  %2030 = vmatpush1.msra.mxu0 0.0
  %2031 = vmatprep.subr.mxu0 0.0
  %2032 = vmatpush1.msra.mxu0 0.0
  %2033 = vmatprep.subr.mxu0 0.0
  %2034 = vmatpush1.msra.mxu0 0.0
  %2035 = vmatprep.subr.mxu0 0.0
  %2036 = vmatpush1.msra.mxu0 0.0
  %2037 = vmatprep.subr.mxu0 0.0
  %2038 = vmatpush1.msra.mxu0 0.0
  %2039 = vmatprep.subr.mxu0 0.0
  %2040 = vmatpush1.msra.mxu0 0.0
  %2041 = vmatprep.subr.mxu0 0.0
  %2042 = vmatpush1.msra.mxu0 0.0
  %2043 = vmatprep.subr.mxu0 0.0
  %2044 = vmatpush1.msra.mxu0 0.0
  %2045 = vmatprep.subr.mxu0 0.0
  %2046 = vmatpush1.msra.mxu0 0.0
  %2047 = vmatprep.subr.mxu0 0.0
  %2048 = vmatpush1.msra.mxu0 0.0
  %2049 = vmatprep.subr.mxu0 0.0
  %2050 = vmatpush1.msra.mxu0 0.0
  %2051 = vmatprep.subr.mxu0 0.0
  %2052 = vmatpush1.msra.mxu0 0.0
  %2053 = vmatprep.subr.mxu0 0.0
  %2054 = vmatpush1.msra.mxu0 0.0
  %2055 = vmatprep.subr.mxu0 0.0
  %2056 = vmatpush1.msra.mxu0 0.0
  %2057 = vmatprep.subr.mxu0 0.0
  %2058 = vmatpush1.msra.mxu0 0.0
  %2059 = vmatprep.mubr.f32.mxu0 0.0
  %2060 = vmatmul.mubr.f32.gmra.mrb[0].mxu0 %v1972
  %v2061 = vpop.f32.mrb[0].mxu0
  %v2062 = vadd.f32 %v1969, %v2061
  %v2063 = vpop.f32.mrb[0].mxu0
  %2064 = vmatprep.mubr.f32.mxu0 0.0
  %2065 = vmatmul.mubr.f32.gmra.mrb[0].mxu0 %v1975
  %v2066 = vpop.f32.mrb[0].mxu0
  %v2067 = vadd.f32 %v1969, %v2066
  %v2068 = vpop.f32.mrb[0].mxu0
  %2069 = vmatprep.mubr.f32.mxu0 0.0
  %2070 = vmatmul.mubr.f32.gmra.mrb[0].mxu0 %v1978
  %v2071 = vpop.f32.mrb[0].mxu0
  %v2072 = vadd.f32 %v1969, %v2071
  %v2073 = vpop.f32.mrb[0].mxu0
  %2074 = vmatprep.mubr.f32.mxu0 0.0
  %2075 = vmatmul.mubr.f32.gmra.mrb[0].mxu0 %v1981
  %v2076 = vpop.f32.mrb[0].mxu0
  %v2077 = vadd.f32 %v1969, %v2076
  %v2078 = vpop.f32.mrb[0].mxu0
  %2079 = vmatprep.mubr.f32.mxu0 0.0
  %2080 = vmatmul.mubr.f32.gmra.mrb[0].mxu0 %v1984
  %v2081 = vpop.f32.mrb[0].mxu0
  %v2082 = vadd.f32 %v1969, %v2081
  %v2083 = vpop.f32.mrb[0].mxu0
  %2084 = vmatprep.mubr.f32.mxu0 0.0
  %2085 = vmatmul.mubr.f32.gmra.mrb[0].mxu0 %v1987
  %v2086 = vpop.f32.mrb[0].mxu0
  %v2087 = vadd.f32 %v1969, %v2086
  %v2088 = vpop.f32.mrb[0].mxu0
  %2089 = vmatprep.mubr.f32.mxu0 0.0
  %2090 = vmatmul.mubr.f32.gmra.mrb[0].mxu0 %v1990
  %v2091 = vpop.f32.mrb[0].mxu0
  %v2092 = vadd.f32 %v1969, %v2091
  %v2093 = vpop.f32.mrb[0].mxu0
  %2094 = vmatprep.mubr.f32.mxu0 0.0
  %2095 = vmatmul.mubr.f32.gmra.mrb[0].mxu0 %v1993
  %v2096 = vpop.f32.mrb[0].mxu0
  %v2097 = vadd.f32 %v1969, %v2096
  %v2098 = vpop.f32.mrb[0].mxu0
  %2099 = vdwg.mxu0
  %vm2100 = vcmask 7168
  %2101 = vst.msk [vmem:[%s9] sm:$0xff] %vm2100, %v2062
  %2102 = vst.msk [vmem:[%s9 + $0x8] sm:$0xff] %vm2100, %v2067
  %2103 = vst.msk [vmem:[%s9 + $0x10] sm:$0xff] %vm2100, %v2072
  %2104 = vst.msk [vmem:[%s9 + $0x18] sm:$0xff] %vm2100, %v2077
  %2105 = vst.msk [vmem:[%s9 + $0x20] sm:$0xff] %vm2100, %v2082
  %2106 = vst.msk [vmem:[%s9 + $0x28] sm:$0xff] %vm2100, %v2087
  %2107 = vst.msk [vmem:[%s9 + $0x30] sm:$0xff] %vm2100, %v2092
  %2108 = vst.msk [vmem:[%s9 + $0x38] sm:$0xff] %vm2100, %v2097
  // Predicated region
  $region38: #{tpu_custom_call.1} parent=0 // pred_check
    _
  $region39: #{tpu_custom_call.1} parent=0 // pred_check_branch
    %2110 = sbr.rel (0) target = $region41
  $region40: #{tpu_custom_call.1} parent=0 // pred_region
    _
  $region41: #{tpu_custom_call.1} parent=0 // pred_fallthru
    _
  // Predicated region
  $region42: #{tpu_custom_call.1} parent=0 // pred_check
    _
  $region43: #{tpu_custom_call.1} parent=0 // pred_check_branch
    %2112 = sbr.rel (0) target = $region45
  $region44: #{tpu_custom_call.1} parent=0 // pred_region
    _
  $region45: #{tpu_custom_call.1} parent=0 // pred_fallthru
    _

</llo_original>
